<compile_context>
chip_gen: v5e
topology: v5e:2x2
jax: 0.10.0
libtpu: 0.0.40
codegen_flags: <defaults>
</compile_context>

<pallas_src>
import numpy as np
import jax
import jax.numpy as jnp
from jax.experimental import pallas as pl
from jax.experimental.pallas import tpu as pltpu


def _round_up(n, m):
    return ((n + m - 1) // m) * m


def encoder_kernel(x_ref, w1_ref, b1_ref, w2_ref, b2_ref, mask_ref, out_ref):
    # First layer: (tb, D) @ (D, Hp) on the MXU, f32 accumulate, bias+ReLU on VPU.
    x = x_ref[...].astype(w1_ref.dtype)
    h = jnp.dot(x, w1_ref[...], preferred_element_type=jnp.float32) + b1_ref[...]
    h = jnp.maximum(h, 0.0)                                        # (tb, Hp) f32

    # Fused second stage: one MXU pass producing [ mean | std | zero-pad ] lanes.
    y = jnp.dot(h.astype(w2_ref.dtype), w2_ref[...],
                preferred_element_type=jnp.float32) + b2_ref[...]

    # ReLU only on the std half; precomputed lane mask (padding lanes are exact
    # zeros, so leaving them un-ReLU'd is a no-op).
    std_cols = mask_ref[...] > 0.5                                  # (1, OUTP)
    y = jnp.where(std_cols, jnp.maximum(y, 0.0), y)

    out_ref[...] = y.astype(out_ref.dtype)                          # lane-dense slab


def init_params(key, input_dim=784, hidden_dim=500, z_dim=20):
    """Deterministic init mimicking nn.Linear's U(-1/sqrt(fan_in), 1/sqrt(fan_in)).
    Weights stored as (in_features, out_features); biases as (out_features,)."""
    ks = jax.random.split(key, 6)

    def linear(kw, kb, fan_in, fan_out):
        bound = 1.0 / np.sqrt(fan_in)
        w = jax.random.uniform(kw, (fan_in, fan_out), jnp.float32, -bound, bound)
        b = jax.random.uniform(kb, (fan_out,), jnp.float32, -bound, bound)
        return w, b

    w1, b1 = linear(ks[0], ks[1], input_dim, hidden_dim)
    wm, bm = linear(ks[2], ks[3], hidden_dim, z_dim)
    ws, bs = linear(ks[4], ks[5], hidden_dim, z_dim)
    return {"w1": w1, "b1": b1, "wm": wm, "bm": bm, "ws": ws, "bs": bs}


def prepare_params(params, *, dtype=jnp.float32, lane=128):
    """Pack per-branch params into fused, lane-padded kernel params.

    dtype controls the HBM storage dtype of the (large) weight matrices; pass
    jnp.bfloat16 on v5e/v6e/v7x to halve weight HBM traffic and use the MXU's
    native input dtype.  Biases and the std mask stay f32 (epilogue is f32).
    """
    D, H = params["w1"].shape
    Z = params["wm"].shape[1]
    Hp = _round_up(H, lane)           # lane-dense hidden
    OUTP = _round_up(2 * Z, lane)     # lane-dense fused output [mean|std|pad]

    w1p = jnp.zeros((D, Hp), jnp.float32).at[:, :H].set(params["w1"]).astype(dtype)
    b1p = jnp.zeros((1, Hp), jnp.float32).at[0, :H].set(params["b1"])

    w2p = jnp.zeros((Hp, OUTP), jnp.float32)
    w2p = w2p.at[:H, :Z].set(params["wm"]).at[:H, Z:2 * Z].set(params["ws"]).astype(dtype)
    b2p = jnp.zeros((1, OUTP), jnp.float32)
    b2p = b2p.at[0, :Z].set(params["bm"]).at[0, Z:2 * Z].set(params["bs"])

    std_mask = jnp.zeros((1, OUTP), jnp.float32).at[0, Z:2 * Z].set(1.0)

    # TODO(synk): if profiling on v5e shows the kernel MXU-bound after bf16,
    # also pad D 784->896 here (and in x) for fully lane-dense K; skip while
    # HBM-bound since it adds +14% x bytes.
    return {"w1": w1p, "b1": b1p, "w2": w2p, "b2": b2p, "std_mask": std_mask,
            "input_dim": D, "z_dim": Z, "hidden_pad": Hp, "out_pad": OUTP}


def encoder_forward(x, kp, *, tile_b=1024, vmem_cap_bytes=48 * 1024 * 1024):
    """x: (B, 784), f32 or bf16.  kp: output of prepare_params.  -> (mean, std) f32."""
    B, D = x.shape
    assert D == kp["input_dim"]
    Hp, OUTP, Z = kp["hidden_pad"], kp["out_pad"], kp["z_dim"]

    # Batch tile: multiple of 8 sublanes, no wrapper-side padding of x.  Clamp
    # so the grid has >= 2 steps whenever possible (v7x: 2 TCs share the
    # "parallel" axis; on v5e/v6e this clamp is harmless).
    tb = _round_up(max(8, min(tile_b, B)), 8)
    if B > 8:
        tb = min(tb, _round_up(pl.cdiv(B, 2), 8))
    grid = (pl.cdiv(B, tb),)

    # Right-sized VMEM limit: double-buffered x/out tiles + resident weights +
    # f32 intermediates, plus headroom, capped well below v7x's 64 MiB physical.
    x_bytes = jnp.dtype(x.dtype).itemsize
    w_bytes = jnp.dtype(kp["w1"].dtype).itemsize
    need = (2 * tb * D * x_bytes                      # x tiles (2 buffers)
            + 2 * tb * OUTP * 4                       # out tiles (2 buffers)
            + 2 * (D * Hp + Hp * OUTP) * w_bytes      # resident weights
            + 2 * (Hp + 2 * OUTP) * 4                 # biases + std mask
            + tb * (Hp + OUTP) * 4)                   # in-kernel f32 h / y
    vmem_limit = int(min(vmem_cap_bytes, max(16 * 1024 * 1024, need + (4 << 20))))

    flops = 2 * B * (D * Hp + Hp * OUTP)
    bytes_accessed = (B * D * x_bytes
                      + (D * Hp + Hp * OUTP) * w_bytes
                      + (Hp + 2 * OUTP) * 4
                      + B * OUTP * 4)

    out = pl.pallas_call(
        encoder_kernel,
        out_shape=jax.ShapeDtypeStruct((B, OUTP), jnp.float32),
        grid_spec=pltpu.PrefetchScalarGridSpec(
            num_scalar_prefetch=0,
            grid=grid,
            in_specs=[
                pl.BlockSpec((tb, D), lambda i: (i, 0)),      # x: streamed over batch
                pl.BlockSpec((D, Hp), lambda i: (0, 0)),      # w1: VMEM resident
                pl.BlockSpec((1, Hp), lambda i: (0, 0)),      # b1
                pl.BlockSpec((Hp, OUTP), lambda i: (0, 0)),   # fused wm||ws
                pl.BlockSpec((1, OUTP), lambda i: (0, 0)),    # fused bm||bs
                pl.BlockSpec((1, OUTP), lambda i: (0, 0)),    # std-branch ReLU mask
            ],
            out_specs=pl.BlockSpec((tb, OUTP), lambda i: (i, 0)),
        ),
        compiler_params=pltpu.CompilerParams(
            dimension_semantics=("parallel",),
            vmem_limit_bytes=vmem_limit,
        ),
        cost_estimate=pl.CostEstimate(
            flops=flops, transcendentals=0, bytes_accessed=bytes_accessed),
    )(x, kp["w1"], kp["b1"], kp["w2"], kp["b2"], kp["std_mask"])

    # TODO(synk): if the consumer can take the packed (B, 2*Z) slab directly,
    # skip these slices to avoid re-reading the output slab in XLA.
    mean = out[:, :Z]
    std = out[:, Z:2 * Z]
    return mean, std


def encoder_reference_np(x, p):
    """float64 numpy reference (matches the PyTorch module's math)."""
    xf = np.asarray(x, np.float64)
    w1 = np.asarray(p["w1"], np.float64); b1 = np.asarray(p["b1"], np.float64)
    wm = np.asarray(p["wm"], np.float64); bm = np.asarray(p["bm"], np.float64)
    ws = np.asarray(p["ws"], np.float64); bs = np.asarray(p["bs"], np.float64)
    h = np.maximum(xf @ w1 + b1[None, :], 0.0)
    mean = h @ wm + bm[None, :]
    std = np.maximum(h @ ws + bs[None, :], 0.0)
    return mean, std


if __name__ == "__main__":
    key = jax.random.PRNGKey(0)
    k_x, k_p = jax.random.split(key)

    INPUT_DIM, HIDDEN_DIM, Z_DIM = 28 * 28, 500, 20
    params = init_params(k_p, INPUT_DIM, HIDDEN_DIM, Z_DIM)

    # --- f32 path, batch divides the tile evenly (grid of 2 batch tiles) -----
    B = 64
    x = jax.random.normal(k_x, (B, INPUT_DIM), jnp.float32)
    kp32 = prepare_params(params, dtype=jnp.float32)
    mean, std = encoder_forward(x, kp32)
    jax.block_until_ready((mean, std))

    mean_ref, std_ref = encoder_reference_np(x, params)
    assert mean.shape == (B, Z_DIM) and std.shape == (B, Z_DIM)
    np.testing.assert_allclose(np.asarray(mean), mean_ref, rtol=1e-4, atol=1e-4)
    np.testing.assert_allclose(np.asarray(std), std_ref, rtol=1e-4, atol=1e-4)
    assert float(jnp.min(std)) >= 0.0  # ReLU on the sigma branch

    # --- f32 path, ragged batch: no wrapper pad copy, partial last block -----
    Br = 50
    xr = jax.random.normal(jax.random.PRNGKey(1), (Br, INPUT_DIM), jnp.float32)
    mean_r, std_r = encoder_forward(xr, kp32)
    jax.block_until_ready((mean_r, std_r))
    mr_ref, sr_ref = encoder_reference_np(xr, params)
    assert mean_r.shape == (Br, Z_DIM) and std_r.shape == (Br, Z_DIM)
    np.testing.assert_allclose(np.asarray(mean_r), mr_ref, rtol=1e-4, atol=1e-4)
    np.testing.assert_allclose(np.asarray(std_r), sr_ref, rtol=1e-4, atol=1e-4)

    # --- bf16-in-HBM path: bf16 x + bf16 packed weights, f32 accumulate ------
    # (In a real pipeline x would already be produced/stored in bf16 upstream.)
    kp16 = prepare_params(params, dtype=jnp.bfloat16)
    x16 = x.astype(jnp.bfloat16)
    mean16, std16 = encoder_forward(x16, kp16)
    jax.block_until_ready((mean16, std16))
    np.testing.assert_allclose(np.asarray(mean16), mean_ref, rtol=5e-2, atol=5e-2)
    np.testing.assert_allclose(np.asarray(std16), std_ref, rtol=5e-2, atol=5e-2)
    assert float(jnp.min(std16)) >= 0.0

    print("KERNEL_OK")
</pallas_src>

<mosaic_0001>
module attributes {stable_mosaic.version = 11 : i64} {
  func.func @encoder_kernel(%arg0: i32, %arg1: memref<32x784xf32, #tpu.memory_space<vmem>>, %arg2: memref<784x512xf32, #tpu.memory_space<vmem>>, %arg3: memref<1x512xf32, #tpu.memory_space<vmem>>, %arg4: memref<512x128xf32, #tpu.memory_space<vmem>>, %arg5: memref<1x128xf32, #tpu.memory_space<vmem>>, %arg6: memref<1x128xf32, #tpu.memory_space<vmem>>, %arg7: memref<32x128xf32, #tpu.memory_space<vmem>>) attributes {dimension_semantics = [#tpu.dimension_semantics<parallel>], iteration_bounds = array<i64: 2>, scalar_prefetch = 0 : i64, scratch_operands = 0 : i64, tpu.core_type = #tpu.core_type<tc>, window_params = [{transform_indices = @transform_0, window_bounds = array<i64: 32, 784>}, {pipeline_mode = #tpu.pipeline_mode<synchronous>, transform_indices = @transform_1, window_bounds = array<i64: 784, 512>}, {pipeline_mode = #tpu.pipeline_mode<synchronous>, transform_indices = @transform_2, window_bounds = array<i64: 1, 512>}, {pipeline_mode = #tpu.pipeline_mode<synchronous>, transform_indices = @transform_3, window_bounds = array<i64: 512, 128>}, {pipeline_mode = #tpu.pipeline_mode<synchronous>, transform_indices = @transform_4, window_bounds = array<i64: 1, 128>}, {pipeline_mode = #tpu.pipeline_mode<synchronous>, transform_indices = @transform_5, window_bounds = array<i64: 1, 128>}, {transform_indices = @transform_6, window_bounds = array<i64: 32, 128>}]} {
    %c0 = arith.constant 0 : index
    %c0_0 = arith.constant 0 : index
    %0 = vector.load %arg1[%c0, %c0_0] : memref<32x784xf32, #tpu.memory_space<vmem>>, vector<32x784xf32>
    %c0_1 = arith.constant 0 : index
    %c0_2 = arith.constant 0 : index
    %1 = vector.load %arg2[%c0_1, %c0_2] : memref<784x512xf32, #tpu.memory_space<vmem>>, vector<784x512xf32>
    %cst = arith.constant dense<0.000000e+00> : vector<32x512xf32>
    %2 = tpu.matmul %0, %1, %cst {dimension_numbers = #tpu.dot_dimension_numbers<[1], [0], [0], [1], [0, 0, 1, 1], [], []>} : vector<32x784xf32>, vector<784x512xf32>, vector<32x512xf32> -> vector<32x512xf32>
    %c0_3 = arith.constant 0 : index
    %c0_4 = arith.constant 0 : index
    %3 = vector.load %arg3[%c0_3, %c0_4] : memref<1x512xf32, #tpu.memory_space<vmem>>, vector<1x512xf32>
    %4 = vector.broadcast %3 : vector<1x512xf32> to vector<32x512xf32>
    %5 = arith.addf %2, %4 : vector<32x512xf32>
    %cst_5 = arith.constant 0.000000e+00 : f32
    %6 = vector.broadcast %cst_5 : f32 to vector<32x512xf32>
    %7 = arith.maximumf %5, %6 : vector<32x512xf32>
    %c0_6 = arith.constant 0 : index
    %c0_7 = arith.constant 0 : index
    %8 = vector.load %arg4[%c0_6, %c0_7] : memref<512x128xf32, #tpu.memory_space<vmem>>, vector<512x128xf32>
    %cst_8 = arith.constant dense<0.000000e+00> : vector<32x128xf32>
    %9 = tpu.matmul %7, %8, %cst_8 {dimension_numbers = #tpu.dot_dimension_numbers<[1], [0], [0], [1], [0, 0, 1, 1], [], []>} : vector<32x512xf32>, vector<512x128xf32>, vector<32x128xf32> -> vector<32x128xf32>
    %c0_9 = arith.constant 0 : index
    %c0_10 = arith.constant 0 : index
    %10 = vector.load %arg5[%c0_9, %c0_10] : memref<1x128xf32, #tpu.memory_space<vmem>>, vector<1x128xf32>
    %11 = vector.broadcast %10 : vector<1x128xf32> to vector<32x128xf32>
    %12 = arith.addf %9, %11 : vector<32x128xf32>
    %c0_11 = arith.constant 0 : index
    %c0_12 = arith.constant 0 : index
    %13 = vector.load %arg6[%c0_11, %c0_12] : memref<1x128xf32, #tpu.memory_space<vmem>>, vector<1x128xf32>
    %cst_13 = arith.constant 5.000000e-01 : f32
    %14 = vector.broadcast %cst_13 : f32 to vector<1x128xf32>
    %15 = arith.cmpf ogt, %13, %14 : vector<1x128xf32>
    %cst_14 = arith.constant 0.000000e+00 : f32
    %16 = vector.broadcast %cst_14 : f32 to vector<32x128xf32>
    %17 = arith.maximumf %12, %16 : vector<32x128xf32>
    %18 = vector.shape_cast %15 : vector<1x128xi1> to vector<1x128xi1>
    %19 = vector.broadcast %18 : vector<1x128xi1> to vector<32x128xi1>
    %20 = arith.select %19, %17, %12 : vector<32x128xi1>, vector<32x128xf32>
    %c0_15 = arith.constant 0 : index
    %c0_16 = arith.constant 0 : index
    %21 = vector.load %arg7[%c0_15, %c0_16] : memref<32x128xf32, #tpu.memory_space<vmem>>, vector<32x128xf32>
    tpu.vector_store %arg7[%c0_15, %c0_16], %20 {strides = array<i32>} : memref<32x128xf32, #tpu.memory_space<vmem>>, vector<32x128xf32>,
    return
  }
  func.func @transform_0(%arg0: i32) -> (i32, i32) {
    %c0_i32 = arith.constant 0 : i32
    %c0_i32_0 = arith.constant 0 : i32
    return %arg0, %c0_i32 : i32, i32
  }
  func.func @transform_1(%arg0: i32) -> (i32, i32) {
    %c0_i32 = arith.constant 0 : i32
    %c0_i32_0 = arith.constant 0 : i32
    %c0_i32_1 = arith.constant 0 : i32
    return %c0_i32, %c0_i32_0 : i32, i32
  }
  func.func @transform_2(%arg0: i32) -> (i32, i32) {
    %c0_i32 = arith.constant 0 : i32
    %c0_i32_0 = arith.constant 0 : i32
    %c0_i32_1 = arith.constant 0 : i32
    return %c0_i32, %c0_i32_0 : i32, i32
  }
  func.func @transform_3(%arg0: i32) -> (i32, i32) {
    %c0_i32 = arith.constant 0 : i32
    %c0_i32_0 = arith.constant 0 : i32
    %c0_i32_1 = arith.constant 0 : i32
    return %c0_i32, %c0_i32_0 : i32, i32
  }
  func.func @transform_4(%arg0: i32) -> (i32, i32) {
    %c0_i32 = arith.constant 0 : i32
    %c0_i32_0 = arith.constant 0 : i32
    %c0_i32_1 = arith.constant 0 : i32
    return %c0_i32, %c0_i32_0 : i32, i32
  }
  func.func @transform_5(%arg0: i32) -> (i32, i32) {
    %c0_i32 = arith.constant 0 : i32
    %c0_i32_0 = arith.constant 0 : i32
    %c0_i32_1 = arith.constant 0 : i32
    return %c0_i32, %c0_i32_0 : i32, i32
  }
  func.func @transform_6(%arg0: i32) -> (i32, i32) {
    %c0_i32 = arith.constant 0 : i32
    %c0_i32_0 = arith.constant 0 : i32
    return %arg0, %c0_i32 : i32, i32
  }
}

</mosaic_0001>

<llo_original>
// kernel: tpu_custom_call.1
$region0: #{tpu_custom_call.1}
  #allocation0 [shape = 'u32[]', space=smem, size = 0x4, offset = 0x4, fixed_abs, tag = 'smem constant byte address 0x4 - core index']
  #allocation1 [shape = 'u32[72,128]{1,0:T(1,128)}', space=vmem, size = 0x9000, scoped, tag = 'internal scratch']
  %s0 = inlined_call_operand.hbm [shape: f32[64,784], index: 0, kind: input, shape index: {}]
  %s1 = inlined_call_operand.hbm [shape: f32[784,512], index: 1, kind: input, shape index: {}]
  %s2 = inlined_call_operand.hbm [shape: f32[1,512], index: 2, kind: input, shape index: {}]
  %s3 = inlined_call_operand.hbm [shape: f32[512,128], index: 3, kind: input, shape index: {}]
  %s4 = inlined_call_operand.hbm [shape: f32[1,128], index: 4, kind: input, shape index: {}]
  %s5 = inlined_call_operand.hbm [shape: f32[1,128], index: 5, kind: input, shape index: {}]
  %s6 = inlined_call_operand.hbm [shape: f32[64,128], index: 6, kind: output, shape index: {}]
  %s7 = sld [smem:[#allocation0]]
  $region81: #{tpu_custom_call.1} parent=0
    _
  %s9 = ssub.s32 1, %s7
  %s10 = scalar_select 0, %s9, %s7
  $region1: #{tpu_custom_call.1} parent=0
    #allocation2 [shape = 'u8[229376]{0}', space=vmem, size = 0x38000, scoped, tag = 'input window, operand 0']
    #allocation3 [shape = 's32[2]{0}', space=sflag, size = 0x8, scoped, tag = 'scoped memory for tpu_custom_call.1']
    #allocation4 [shape = 's32[2]{0}', space=sflag, size = 0x8, scoped, tag = 'scoped memory for tpu_custom_call.1']
    #allocation5 [shape = 'u8[1605632]{0}', space=vmem, size = 0x188000, scoped, tag = 'input window, operand 1, single buffered']
    #allocation6 [shape = 's32[1]{0}', space=sflag, size = 0x4, scoped, tag = 'scoped memory for tpu_custom_call.1']
    #allocation7 [shape = 'u8[2048]{0}', space=vmem, size = 0x800, scoped, tag = 'input window, operand 2, single buffered']
    #allocation8 [shape = 'u8[262144]{0}', space=vmem, size = 0x40000, scoped, tag = 'input window, operand 3, single buffered']
    #allocation9 [shape = 's32[1]{0}', space=sflag, size = 0x4, scoped, tag = 'scoped memory for tpu_custom_call.1']
    #allocation10 [shape = 'u8[512]{0}', space=vmem, size = 0x400, scoped, tag = 'input window, operand 4, single buffered']
    #allocation11 [shape = 'u8[512]{0}', space=vmem, size = 0x400, scoped, tag = 'input window, operand 5, single buffered']
    #allocation12 [shape = 's32[1]{0}', space=sflag, size = 0x4, scoped, tag = 'scoped memory for tpu_custom_call.1']
    #allocation13 [shape = 'u8[32768]{0}', space=vmem, size = 0x8000, scoped, tag = 'output window, operand 0']
    %11 = vsyncpa [#allocation3], 0
    %s12 = scalar_lea.sflag [#allocation3], 1
    %13 = vsyncpa %s12, 0
    %14 = vsyncpa [#allocation6], 0
    %15 = vsyncpa [#allocation9], 0
    %16 = vsyncpa [#allocation12], 0
    %17 = vsyncpa [#allocation4], 0
    %s18 = scalar_lea.sflag [#allocation4], 1
    %19 = vsyncpa %s18, 0
    loop: start=0, step=1, limit=4
    $region2: #{tpu_custom_call.1} parent=1 // loop_pre_header
      _
    $region3: #{tpu_custom_call.1} parent=1 // loop_header
      %s21 = sphi 0, %s25
      %p22 = scmp.ge.s32.totalorder %s21, 4
      %s31 = sphi 0, %s33
      %s34 = sphi 0, %s31
      %s35 = sphi 0, %s34
      %s51 = sphi 0, %s35
      %s55 = sphi 0, %s55
      %s57 = sphi 0, %s55
      %s58 = sphi 0, %s57
      %s72 = sphi 0, %s58
      %s76 = sphi 0, %s76
      %s78 = sphi 0, %s76
      %s79 = sphi 0, %s78
      %s93 = sphi 0, %s79
      %s97 = sphi 0, %s97
      %s99 = sphi 0, %s97
      %s100 = sphi 0, %s99
      %s114 = sphi 0, %s100
      %s118 = sphi 0, %s118
      %s120 = sphi 0, %s118
      %s121 = sphi 0, %s120
      %s135 = sphi 0, %s121
      %s139 = sphi 0, %s139
      %s141 = sphi 0, %s139
      %s142 = sphi 0, %s141
      %s156 = sphi 0, %s142
      %s162 = sphi 0, %s164
      %s165 = sphi 0, %s162
      %s166 = sphi 0, %s165
      %s182 = sphi 0, %s166
    $region4: #{tpu_custom_call.1} parent=1 // loop_header_branch
      %24 = sbr.rel (%p22) target = $region8
    $region5: #{tpu_custom_call.1} parent=1 // loop_body
      %s26 = ssub.s32 %s21, 1
      %s27 = ssub.s32 %s21, 2
      %s28 = sadd.s32 %s21, 1
      %s29 = ssub.s32 %s21, %s28
      %p30 = scmp.eq.s32.totalorder %s29, 0
      %s32 = sadd.s32 %s31, 1
      %s33 = scalar_select %p30, %s31, %s32
      %p36 = pneg %p30
      %p37 = scmp.eq.s32.totalorder %s21, 1
      %p38 = por %p36, %p37
      %p39 = scmp.ne.s32.totalorder %s31, %s34
      %p40 = scmp.eq.s32.totalorder %s21, 0
      %p41 = por %p39, %p40
      %p42 = scmp.ne.s32.totalorder %s31, %s34
      %p43 = scmp.eq.s32.totalorder %s26, 1
      %p44 = por %p42, %p43
      %p45 = scmp.ne.s32.totalorder %s34, %s35
      %p46 = scmp.eq.s32.totalorder %s26, 0
      %p47 = por %p45, %p46
      %p48 = scmp.ne.s32.totalorder %s34, %s35
      %p49 = scmp.eq.s32.totalorder %s27, 1
      %p50 = por %p48, %p49
      %p52 = scmp.ne.s32.totalorder %s35, %s51
      %p53 = scmp.eq.s32.totalorder %s27, 0
      %p54 = por %p52, %p53
      %s56 = sadd.s32 %s55, 1
      %p59 = scmp.eq.s32.totalorder %s21, 1
      %p60 = scmp.ne.s32.totalorder %s55, %s57
      %p61 = scmp.eq.s32.totalorder %s21, 0
      %p62 = por %p60, %p61
      %p63 = scmp.ne.s32.totalorder %s55, %s57
      %p64 = scmp.eq.s32.totalorder %s26, 1
      %p65 = por %p63, %p64
      %p66 = scmp.ne.s32.totalorder %s57, %s58
      %p67 = scmp.eq.s32.totalorder %s26, 0
      %p68 = por %p66, %p67
      %p69 = scmp.ne.s32.totalorder %s57, %s58
      %p70 = scmp.eq.s32.totalorder %s27, 1
      %p71 = por %p69, %p70
      %p73 = scmp.ne.s32.totalorder %s58, %s72
      %p74 = scmp.eq.s32.totalorder %s27, 0
      %p75 = por %p73, %p74
      %s77 = sadd.s32 %s76, 1
      %p80 = scmp.eq.s32.totalorder %s21, 1
      %p81 = scmp.ne.s32.totalorder %s76, %s78
      %p82 = scmp.eq.s32.totalorder %s21, 0
      %p83 = por %p81, %p82
      %p84 = scmp.ne.s32.totalorder %s76, %s78
      %p85 = scmp.eq.s32.totalorder %s26, 1
      %p86 = por %p84, %p85
      %p87 = scmp.ne.s32.totalorder %s78, %s79
      %p88 = scmp.eq.s32.totalorder %s26, 0
      %p89 = por %p87, %p88
      %p90 = scmp.ne.s32.totalorder %s78, %s79
      %p91 = scmp.eq.s32.totalorder %s27, 1
      %p92 = por %p90, %p91
      %p94 = scmp.ne.s32.totalorder %s79, %s93
      %p95 = scmp.eq.s32.totalorder %s27, 0
      %p96 = por %p94, %p95
      %s98 = sadd.s32 %s97, 1
      %p101 = scmp.eq.s32.totalorder %s21, 1
      %p102 = scmp.ne.s32.totalorder %s97, %s99
      %p103 = scmp.eq.s32.totalorder %s21, 0
      %p104 = por %p102, %p103
      %p105 = scmp.ne.s32.totalorder %s97, %s99
      %p106 = scmp.eq.s32.totalorder %s26, 1
      %p107 = por %p105, %p106
      %p108 = scmp.ne.s32.totalorder %s99, %s100
      %p109 = scmp.eq.s32.totalorder %s26, 0
      %p110 = por %p108, %p109
      %p111 = scmp.ne.s32.totalorder %s99, %s100
      %p112 = scmp.eq.s32.totalorder %s27, 1
      %p113 = por %p111, %p112
      %p115 = scmp.ne.s32.totalorder %s100, %s114
      %p116 = scmp.eq.s32.totalorder %s27, 0
      %p117 = por %p115, %p116
      %s119 = sadd.s32 %s118, 1
      %p122 = scmp.eq.s32.totalorder %s21, 1
      %p123 = scmp.ne.s32.totalorder %s118, %s120
      %p124 = scmp.eq.s32.totalorder %s21, 0
      %p125 = por %p123, %p124
      %p126 = scmp.ne.s32.totalorder %s118, %s120
      %p127 = scmp.eq.s32.totalorder %s26, 1
      %p128 = por %p126, %p127
      %p129 = scmp.ne.s32.totalorder %s120, %s121
      %p130 = scmp.eq.s32.totalorder %s26, 0
      %p131 = por %p129, %p130
      %p132 = scmp.ne.s32.totalorder %s120, %s121
      %p133 = scmp.eq.s32.totalorder %s27, 1
      %p134 = por %p132, %p133
      %p136 = scmp.ne.s32.totalorder %s121, %s135
      %p137 = scmp.eq.s32.totalorder %s27, 0
      %p138 = por %p136, %p137
      %s140 = sadd.s32 %s139, 1
      %p143 = scmp.eq.s32.totalorder %s21, 1
      %p144 = scmp.ne.s32.totalorder %s139, %s141
      %p145 = scmp.eq.s32.totalorder %s21, 0
      %p146 = por %p144, %p145
      %p147 = scmp.ne.s32.totalorder %s139, %s141
      %p148 = scmp.eq.s32.totalorder %s26, 1
      %p149 = por %p147, %p148
      %p150 = scmp.ne.s32.totalorder %s141, %s142
      %p151 = scmp.eq.s32.totalorder %s26, 0
      %p152 = por %p150, %p151
      %p153 = scmp.ne.s32.totalorder %s141, %s142
      %p154 = scmp.eq.s32.totalorder %s27, 1
      %p155 = por %p153, %p154
      %p157 = scmp.ne.s32.totalorder %s142, %s156
      %p158 = scmp.eq.s32.totalorder %s27, 0
      %p159 = por %p157, %p158
      %s160 = ssub.s32 %s21, %s28
      %p161 = scmp.eq.s32.totalorder %s160, 0
      %s163 = sadd.s32 %s162, 1
      %s164 = scalar_select %p161, %s162, %s163
      %p167 = pneg %p161
      %p168 = scmp.eq.s32.totalorder %s21, 1
      %p169 = por %p167, %p168
      %p170 = scmp.ne.s32.totalorder %s162, %s165
      %p171 = scmp.eq.s32.totalorder %s21, 0
      %p172 = por %p170, %p171
      %p173 = scmp.ne.s32.totalorder %s162, %s165
      %p174 = scmp.eq.s32.totalorder %s26, 1
      %p175 = por %p173, %p174
      %p176 = scmp.ne.s32.totalorder %s165, %s166
      %p177 = scmp.eq.s32.totalorder %s26, 0
      %p178 = por %p176, %p177
      %p179 = scmp.ne.s32.totalorder %s165, %s166
      %p180 = scmp.eq.s32.totalorder %s27, 1
      %p181 = por %p179, %p180
      %p183 = scmp.ne.s32.totalorder %s166, %s182
      %p184 = scmp.eq.s32.totalorder %s27, 0
      %p185 = por %p183, %p184
      %p186 = scmp.le.s32.totalorder 1, %s21
      %p187 = scmp.lt.s32.totalorder %s21, 3
      %p188 = pnand %p186, %p187
      %p189 = pneg %p188
      // Predicated region
      $region9: #{tpu_custom_call.1} parent=5 // pred_check
        _
      $region10: #{tpu_custom_call.1} parent=5 // pred_check_branch
        %191 = sbr.rel (%p188) target = $region12
      $region11: #{tpu_custom_call.1} parent=5 // pred_region
        %s192 = ssub.s32 %s21, 1
        // Predicated region
        $region13: #{tpu_custom_call.1} parent=11 // pred_check
          %p193 = pneg %p68
        $region14: #{tpu_custom_call.1} parent=11 // pred_check_branch
          %195 = sbr.rel (%p193) target = $region16
        $region15: #{tpu_custom_call.1} parent=11 // pred_region
          %197 = vsyncadd [#allocation6], 0
          %s198 = sshll.u32 %s1, 4
          %s199 = int_to_ptr.hbm [resolvable:$true] %s198
          %s200 = sshll.u32 [#allocation5], 4
          %s201 = int_to_ptr.vmem [resolvable:$true] %s200
          %206 = dma.hbm_to_vmem [thread:$0]  %s199, 50176, %s201, [#allocation6], 512, 512, 32
        $region16: #{tpu_custom_call.1} parent=11 // pred_fallthru
          _
        // Predicated region
        $region17: #{tpu_custom_call.1} parent=11 // pred_check
          %p207 = pneg %p89
        $region18: #{tpu_custom_call.1} parent=11 // pred_check_branch
          %209 = sbr.rel (%p207) target = $region20
        $region19: #{tpu_custom_call.1} parent=11 // pred_region
          %211 = vsyncadd [#allocation6], 0
          %s213 = sshll.u32 %s2, 4
          %s214 = int_to_ptr.hbm [resolvable:$true] %s213
          %s215 = sshll.u32 [#allocation7], 4
          %s216 = int_to_ptr.vmem [resolvable:$true] %s215
          %218 = dma.hbm_to_vmem [thread:$0]  %s214, 64, %s216, [#allocation6]
        $region20: #{tpu_custom_call.1} parent=11 // pred_fallthru
          _
        // Predicated region
        $region21: #{tpu_custom_call.1} parent=11 // pred_check
          %p219 = pneg %p110
        $region22: #{tpu_custom_call.1} parent=11 // pred_check_branch
          %221 = sbr.rel (%p219) target = $region24
        $region23: #{tpu_custom_call.1} parent=11 // pred_region
          %223 = vsyncadd [#allocation9], 0
          %s224 = sshll.u32 %s3, 4
          %s225 = int_to_ptr.hbm [resolvable:$true] %s224
          %s226 = sshll.u32 [#allocation8], 4
          %s227 = int_to_ptr.vmem [resolvable:$true] %s226
          %232 = dma.hbm_to_vmem [thread:$0]  %s225, 8192, %s227, [#allocation9], 128, 128, 8
        $region24: #{tpu_custom_call.1} parent=11 // pred_fallthru
          _
        // Predicated region
        $region25: #{tpu_custom_call.1} parent=11 // pred_check
          %p233 = pneg %p131
        $region26: #{tpu_custom_call.1} parent=11 // pred_check_branch
          %235 = sbr.rel (%p233) target = $region28
        $region27: #{tpu_custom_call.1} parent=11 // pred_region
          %237 = vsyncadd [#allocation9], 0
          %s239 = sshll.u32 %s4, 4
          %s240 = int_to_ptr.hbm [resolvable:$true] %s239
          %s241 = sshll.u32 [#allocation10], 4
          %s242 = int_to_ptr.vmem [resolvable:$true] %s241
          %244 = dma.hbm_to_vmem [thread:$0]  %s240, 16, %s242, [#allocation9]
        $region28: #{tpu_custom_call.1} parent=11 // pred_fallthru
          _
        // Predicated region
        $region29: #{tpu_custom_call.1} parent=11 // pred_check
          %p245 = pneg %p152
        $region30: #{tpu_custom_call.1} parent=11 // pred_check_branch
          %247 = sbr.rel (%p245) target = $region32
        $region31: #{tpu_custom_call.1} parent=11 // pred_region
          %249 = vsyncadd [#allocation12], 0
          %s251 = sshll.u32 %s5, 4
          %s252 = int_to_ptr.hbm [resolvable:$true] %s251
          %s253 = sshll.u32 [#allocation11], 4
          %s254 = int_to_ptr.vmem [resolvable:$true] %s253
          %256 = dma.hbm_to_vmem [thread:$0]  %s252, 16, %s254, [#allocation12]
        $region32: #{tpu_custom_call.1} parent=11 // pred_fallthru
          _
      $region12: #{tpu_custom_call.1} parent=5 // pred_fallthru
        _
      %p257 = scmp.lt.s32.totalorder %s21, 2
      // Predicated region
      $region33: #{tpu_custom_call.1} parent=5 // pred_check
        %p258 = pneg %p257
      $region34: #{tpu_custom_call.1} parent=5 // pred_check_branch
        %260 = sbr.rel (%p258) target = $region36
      $region35: #{tpu_custom_call.1} parent=5 // pred_region
        // Predicated region
        $region37: #{tpu_custom_call.1} parent=35 // pred_check
          %p261 = pneg %p41
        $region38: #{tpu_custom_call.1} parent=35 // pred_check_branch
          %263 = sbr.rel (%p261) target = $region40
        $region39: #{tpu_custom_call.1} parent=35 // pred_region
          %s264 = sand.u32 %s31, 1
          %s265 = scalar_lea.sflag [#allocation3], %s264
          %s266 = sand.u32 %s31, 1
          %s267 = smul.addr %s266, 224
          %s268 = scalar_lea.vmem [#allocation2], %s267
          %s269 = smul.u32 4, %s21
          %271 = vsyncadd %s265, 0
          %s272 = smul.addr %s269, 7
          %s273 = smul.addr %s272, 8
          %s274 = scalar_lea.hbm %s0, %s273
          %s275 = sshll.u32 %s274, 4
          %s276 = int_to_ptr.hbm [resolvable:$true] %s275
          %s277 = sshll.u32 %s268, 4
          %s278 = int_to_ptr.vmem [resolvable:$true] %s277
          %283 = dma.hbm_to_vmem [thread:$0]  %s276, 3584, %s278, %s265, 896, 896, 56
        $region40: #{tpu_custom_call.1} parent=35 // pred_fallthru
          _
      $region36: #{tpu_custom_call.1} parent=5 // pred_fallthru
        _
      %p284 = scmp.le.s32.totalorder 1, %s21
      %p285 = scmp.lt.s32.totalorder %s21, 3
      %p286 = pnand %p284, %p285
      %p287 = pneg %p286
      // Predicated region
      $region41: #{tpu_custom_call.1} parent=5 // pred_check
        _
      $region42: #{tpu_custom_call.1} parent=5 // pred_check_branch
        %289 = sbr.rel (%p286) target = $region44
      $region43: #{tpu_custom_call.1} parent=5 // pred_region
        %s290 = ssub.s32 %s21, 1
        %s291 = sand.u32 %s34, 1
        %s292 = scalar_lea.sflag [#allocation3], %s291
        %s293 = sand.u32 %s34, 1
        %s294 = smul.addr %s293, 224
        %s295 = scalar_lea.vmem [#allocation2], %s294
        // Predicated region
        $region45: #{tpu_custom_call.1} parent=43 // pred_check
          %p296 = pneg %p47
        $region46: #{tpu_custom_call.1} parent=43 // pred_check_branch
          %298 = sbr.rel (%p296) target = $region48
        $region47: #{tpu_custom_call.1} parent=43 // pred_region
          %300 = dma.done %s292, 3584
        $region48: #{tpu_custom_call.1} parent=43 // pred_fallthru
          _
        // Predicated region
        $region49: #{tpu_custom_call.1} parent=43 // pred_check
          %p301 = pneg %p68
        $region50: #{tpu_custom_call.1} parent=43 // pred_check_branch
          %303 = sbr.rel (%p301) target = $region52
        $region51: #{tpu_custom_call.1} parent=43 // pred_region
          %305 = dma.done [#allocation6], 50176
        $region52: #{tpu_custom_call.1} parent=43 // pred_fallthru
          _
        // Predicated region
        $region53: #{tpu_custom_call.1} parent=43 // pred_check
          %p306 = pneg %p89
        $region54: #{tpu_custom_call.1} parent=43 // pred_check_branch
          %308 = sbr.rel (%p306) target = $region56
        $region55: #{tpu_custom_call.1} parent=43 // pred_region
          %310 = dma.done [#allocation6], 64
        $region56: #{tpu_custom_call.1} parent=43 // pred_fallthru
          _
        // Predicated region
        $region57: #{tpu_custom_call.1} parent=43 // pred_check
          %p311 = pneg %p110
        $region58: #{tpu_custom_call.1} parent=43 // pred_check_branch
          %313 = sbr.rel (%p311) target = $region60
        $region59: #{tpu_custom_call.1} parent=43 // pred_region
          %315 = dma.done [#allocation9], 8192
        $region60: #{tpu_custom_call.1} parent=43 // pred_fallthru
          _
        // Predicated region
        $region61: #{tpu_custom_call.1} parent=43 // pred_check
          %p316 = pneg %p131
        $region62: #{tpu_custom_call.1} parent=43 // pred_check_branch
          %318 = sbr.rel (%p316) target = $region64
        $region63: #{tpu_custom_call.1} parent=43 // pred_region
          %320 = dma.done [#allocation9], 16
        $region64: #{tpu_custom_call.1} parent=43 // pred_fallthru
          _
        // Predicated region
        $region65: #{tpu_custom_call.1} parent=43 // pred_check
          %p321 = pneg %p152
        $region66: #{tpu_custom_call.1} parent=43 // pred_check_branch
          %323 = sbr.rel (%p321) target = $region68
        $region67: #{tpu_custom_call.1} parent=43 // pred_region
          %325 = dma.done [#allocation12], 16
        $region68: #{tpu_custom_call.1} parent=43 // pred_fallthru
          _
        %s326 = sand.u32 %s34, 1
        %s327 = scalar_lea.sflag [#allocation3], %s326
        %s328 = sand.u32 %s34, 1
        %s329 = smul.addr %s328, 224
        %s330 = scalar_lea.vmem [#allocation2], %s329
        %p331 = pneg %p47
        %p332 = pneg %p44
        %p333 = pneg %p68
        %p334 = pneg %p65
        %p335 = pneg %p89
        %p336 = pneg %p86
        %p337 = pneg %p110
        %p338 = pneg %p107
        %p339 = pneg %p131
        %p340 = pneg %p128
        %p341 = pneg %p152
        %p342 = pneg %p149
        %p343 = pneg %p178
        %p344 = pneg %p175
        %s345 = sand.u32 %s165, 1
        %s346 = scalar_lea.sflag [#allocation4], %s345
        %s347 = sand.u32 %s165, 1
        %s348 = smul.addr %s347, 32
        %s349 = scalar_lea.vmem [#allocation13], %s348
        %s350 = smul.u32 4, %s26
        %s351 = smul.u32 4, %s26
        %v352 = vld [vmem:[%s295] sm:$0xff]
        %v353 = vld [vmem:[%s295 + $0x8] sm:$0xff]
        %v354 = vld [vmem:[%s295 + $0x10] sm:$0xff]
        %v355 = vld [vmem:[%s295 + $0x18] sm:$0xff]
        %v356 = vld [vmem:[%s295 + $0x20] sm:$0xff]
        %v357 = vld [vmem:[%s295 + $0x28] sm:$0xff]
        %v358 = vld [vmem:[%s295 + $0x30] sm:$0xff]
        %v359 = vld [vmem:[%s295 + $0x38] sm:$0xff]
        %v360 = vld [vmem:[%s295 + $0x40] sm:$0xff]
        %v361 = vld [vmem:[%s295 + $0x48] sm:$0xff]
        %v362 = vld [vmem:[%s295 + $0x50] sm:$0xff]
        %v363 = vld [vmem:[%s295 + $0x58] sm:$0xff]
        %v364 = vld [vmem:[%s295 + $0x60] sm:$0xff]
        %v365 = vld [vmem:[%s295 + $0x68] sm:$0xff]
        %v366 = vld [vmem:[%s295 + $0x70] sm:$0xff]
        %v367 = vld [vmem:[%s295 + $0x78] sm:$0xff]
        %v368 = vld [vmem:[%s295 + $0x80] sm:$0xff]
        %v369 = vld [vmem:[%s295 + $0x88] sm:$0xff]
        %v370 = vld [vmem:[%s295 + $0x90] sm:$0xff]
        %v371 = vld [vmem:[%s295 + $0x98] sm:$0xff]
        %v372 = vld [vmem:[%s295 + $0xa0] sm:$0xff]
        %v373 = vld [vmem:[%s295 + $0xa8] sm:$0xff]
        %v374 = vld [vmem:[%s295 + $0xb0] sm:$0xff]
        %v375 = vld [vmem:[%s295 + $0xb8] sm:$0xff]
        %v376 = vld [vmem:[%s295 + $0xc0] sm:$0xff]
        %v377 = vld [vmem:[%s295 + $0xc8] sm:$0xff]
        %v378 = vld [vmem:[%s295 + $0xd0] sm:$0xff]
        %v379 = vld [vmem:[%s295 + $0xd8] sm:$0xff]
        %v380 = vld [vmem:[#allocation5] sm:$0xff]
        %v381 = vld [vmem:[#allocation5 + $0x8] sm:$0xff]
        %v382 = vld [vmem:[#allocation5 + $0x10] sm:$0xff]
        %v383 = vld [vmem:[#allocation5 + $0x18] sm:$0xff]
        %v384 = vld [vmem:[#allocation5 + $0x20] sm:$0xff]
        %v385 = vld [vmem:[#allocation5 + $0x28] sm:$0xff]
        %v386 = vld [vmem:[#allocation5 + $0x30] sm:$0xff]
        %v387 = vld [vmem:[#allocation5 + $0x38] sm:$0xff]
        %v388 = vld [vmem:[#allocation5 + $0x40] sm:$0xff]
        %v389 = vld [vmem:[#allocation5 + $0x48] sm:$0xff]
        %v390 = vld [vmem:[#allocation5 + $0x50] sm:$0xff]
        %v391 = vld [vmem:[#allocation5 + $0x58] sm:$0xff]
        %v392 = vld [vmem:[#allocation5 + $0x60] sm:$0xff]
        %v393 = vld [vmem:[#allocation5 + $0x68] sm:$0xff]
        %v394 = vld [vmem:[#allocation5 + $0x70] sm:$0xff]
        %v395 = vld [vmem:[#allocation5 + $0x78] sm:$0xff]
        %v396 = vld [vmem:[#allocation5 + $0x80] sm:$0xff]
        %v397 = vld [vmem:[#allocation5 + $0x88] sm:$0xff]
        %v398 = vld [vmem:[#allocation5 + $0x90] sm:$0xff]
        %v399 = vld [vmem:[#allocation5 + $0x98] sm:$0xff]
        %v400 = vld [vmem:[#allocation5 + $0xa0] sm:$0xff]
        %v401 = vld [vmem:[#allocation5 + $0xa8] sm:$0xff]
        %v402 = vld [vmem:[#allocation5 + $0xb0] sm:$0xff]
        %v403 = vld [vmem:[#allocation5 + $0xb8] sm:$0xff]
        %v404 = vld [vmem:[#allocation5 + $0xc0] sm:$0xff]
        %v405 = vld [vmem:[#allocation5 + $0xc8] sm:$0xff]
        %v406 = vld [vmem:[#allocation5 + $0xd0] sm:$0xff]
        %v407 = vld [vmem:[#allocation5 + $0xd8] sm:$0xff]
        %v408 = vld [vmem:[#allocation5 + $0xe0] sm:$0xff]
        %v409 = vld [vmem:[#allocation5 + $0xe8] sm:$0xff]
        %v410 = vld [vmem:[#allocation5 + $0xf0] sm:$0xff]
        %v411 = vld [vmem:[#allocation5 + $0xf8] sm:$0xff]
        %v412 = vld [vmem:[#allocation5 + $0x100] sm:$0xff]
        %v413 = vld [vmem:[#allocation5 + $0x108] sm:$0xff]
        %v414 = vld [vmem:[#allocation5 + $0x110] sm:$0xff]
        %v415 = vld [vmem:[#allocation5 + $0x118] sm:$0xff]
        %v416 = vld [vmem:[#allocation5 + $0x120] sm:$0xff]
        %v417 = vld [vmem:[#allocation5 + $0x128] sm:$0xff]
        %v418 = vld [vmem:[#allocation5 + $0x130] sm:$0xff]
        %v419 = vld [vmem:[#allocation5 + $0x138] sm:$0xff]
        %v420 = vld [vmem:[#allocation5 + $0x140] sm:$0xff]
        %v421 = vld [vmem:[#allocation5 + $0x148] sm:$0xff]
        %v422 = vld [vmem:[#allocation5 + $0x150] sm:$0xff]
        %v423 = vld [vmem:[#allocation5 + $0x158] sm:$0xff]
        %v424 = vld [vmem:[#allocation5 + $0x160] sm:$0xff]
        %v425 = vld [vmem:[#allocation5 + $0x168] sm:$0xff]
        %v426 = vld [vmem:[#allocation5 + $0x170] sm:$0xff]
        %v427 = vld [vmem:[#allocation5 + $0x178] sm:$0xff]
        %v428 = vld [vmem:[#allocation5 + $0x180] sm:$0xff]
        %v429 = vld [vmem:[#allocation5 + $0x188] sm:$0xff]
        %v430 = vld [vmem:[#allocation5 + $0x190] sm:$0xff]
        %v431 = vld [vmem:[#allocation5 + $0x198] sm:$0xff]
        %v432 = vld [vmem:[#allocation5 + $0x1a0] sm:$0xff]
        %v433 = vld [vmem:[#allocation5 + $0x1a8] sm:$0xff]
        %v434 = vld [vmem:[#allocation5 + $0x1b0] sm:$0xff]
        %v435 = vld [vmem:[#allocation5 + $0x1b8] sm:$0xff]
        %v436 = vld [vmem:[#allocation5 + $0x1c0] sm:$0xff]
        %v437 = vld [vmem:[#allocation5 + $0x1c8] sm:$0xff]
        %v438 = vld [vmem:[#allocation5 + $0x1d0] sm:$0xff]
        %v439 = vld [vmem:[#allocation5 + $0x1d8] sm:$0xff]
        %v440 = vld [vmem:[#allocation5 + $0x1e0] sm:$0xff]
        %v441 = vld [vmem:[#allocation5 + $0x1e8] sm:$0xff]
        %v442 = vld [vmem:[#allocation5 + $0x1f0] sm:$0xff]
        %v443 = vld [vmem:[#allocation5 + $0x1f8] sm:$0xff]
        %v444 = vld [vmem:[#allocation5 + $0x200] sm:$0xff]
        %v445 = vld [vmem:[#allocation5 + $0x208] sm:$0xff]
        %v446 = vld [vmem:[#allocation5 + $0x210] sm:$0xff]
        %v447 = vld [vmem:[#allocation5 + $0x218] sm:$0xff]
        %v448 = vld [vmem:[#allocation5 + $0x220] sm:$0xff]
        %v449 = vld [vmem:[#allocation5 + $0x228] sm:$0xff]
        %v450 = vld [vmem:[#allocation5 + $0x230] sm:$0xff]
        %v451 = vld [vmem:[#allocation5 + $0x238] sm:$0xff]
        %v452 = vld [vmem:[#allocation5 + $0x240] sm:$0xff]
        %v453 = vld [vmem:[#allocation5 + $0x248] sm:$0xff]
        %v454 = vld [vmem:[#allocation5 + $0x250] sm:$0xff]
        %v455 = vld [vmem:[#allocation5 + $0x258] sm:$0xff]
        %v456 = vld [vmem:[#allocation5 + $0x260] sm:$0xff]
        %v457 = vld [vmem:[#allocation5 + $0x268] sm:$0xff]
        %v458 = vld [vmem:[#allocation5 + $0x270] sm:$0xff]
        %v459 = vld [vmem:[#allocation5 + $0x278] sm:$0xff]
        %v460 = vld [vmem:[#allocation5 + $0x280] sm:$0xff]
        %v461 = vld [vmem:[#allocation5 + $0x288] sm:$0xff]
        %v462 = vld [vmem:[#allocation5 + $0x290] sm:$0xff]
        %v463 = vld [vmem:[#allocation5 + $0x298] sm:$0xff]
        %v464 = vld [vmem:[#allocation5 + $0x2a0] sm:$0xff]
        %v465 = vld [vmem:[#allocation5 + $0x2a8] sm:$0xff]
        %v466 = vld [vmem:[#allocation5 + $0x2b0] sm:$0xff]
        %v467 = vld [vmem:[#allocation5 + $0x2b8] sm:$0xff]
        %v468 = vld [vmem:[#allocation5 + $0x2c0] sm:$0xff]
        %v469 = vld [vmem:[#allocation5 + $0x2c8] sm:$0xff]
        %v470 = vld [vmem:[#allocation5 + $0x2d0] sm:$0xff]
        %v471 = vld [vmem:[#allocation5 + $0x2d8] sm:$0xff]
        %v472 = vld [vmem:[#allocation5 + $0x2e0] sm:$0xff]
        %v473 = vld [vmem:[#allocation5 + $0x2e8] sm:$0xff]
        %v474 = vld [vmem:[#allocation5 + $0x2f0] sm:$0xff]
        %v475 = vld [vmem:[#allocation5 + $0x2f8] sm:$0xff]
        %v476 = vld [vmem:[#allocation5 + $0x300] sm:$0xff]
        %v477 = vld [vmem:[#allocation5 + $0x308] sm:$0xff]
        %v478 = vld [vmem:[#allocation5 + $0x310] sm:$0xff]
        %v479 = vld [vmem:[#allocation5 + $0x318] sm:$0xff]
        %v480 = vld [vmem:[#allocation5 + $0x320] sm:$0xff]
        %v481 = vld [vmem:[#allocation5 + $0x328] sm:$0xff]
        %v482 = vld [vmem:[#allocation5 + $0x330] sm:$0xff]
        %v483 = vld [vmem:[#allocation5 + $0x338] sm:$0xff]
        %v484 = vld [vmem:[#allocation5 + $0x340] sm:$0xff]
        %v485 = vld [vmem:[#allocation5 + $0x348] sm:$0xff]
        %v486 = vld [vmem:[#allocation5 + $0x350] sm:$0xff]
        %v487 = vld [vmem:[#allocation5 + $0x358] sm:$0xff]
        %v488 = vld [vmem:[#allocation5 + $0x360] sm:$0xff]
        %v489 = vld [vmem:[#allocation5 + $0x368] sm:$0xff]
        %v490 = vld [vmem:[#allocation5 + $0x370] sm:$0xff]
        %v491 = vld [vmem:[#allocation5 + $0x378] sm:$0xff]
        %v492 = vld [vmem:[#allocation5 + $0x380] sm:$0xff]
        %v493 = vld [vmem:[#allocation5 + $0x388] sm:$0xff]
        %v494 = vld [vmem:[#allocation5 + $0x390] sm:$0xff]
        %v495 = vld [vmem:[#allocation5 + $0x398] sm:$0xff]
        %v496 = vld [vmem:[#allocation5 + $0x3a0] sm:$0xff]
        %v497 = vld [vmem:[#allocation5 + $0x3a8] sm:$0xff]
        %v498 = vld [vmem:[#allocation5 + $0x3b0] sm:$0xff]
        %v499 = vld [vmem:[#allocation5 + $0x3b8] sm:$0xff]
        %v500 = vld [vmem:[#allocation5 + $0x3c0] sm:$0xff]
        %v501 = vld [vmem:[#allocation5 + $0x3c8] sm:$0xff]
        %v502 = vld [vmem:[#allocation5 + $0x3d0] sm:$0xff]
        %v503 = vld [vmem:[#allocation5 + $0x3d8] sm:$0xff]
        %v504 = vld [vmem:[#allocation5 + $0x3e0] sm:$0xff]
        %v505 = vld [vmem:[#allocation5 + $0x3e8] sm:$0xff]
        %v506 = vld [vmem:[#allocation5 + $0x3f0] sm:$0xff]
        %v507 = vld [vmem:[#allocation5 + $0x3f8] sm:$0xff]
        %v508 = vld [vmem:[#allocation5 + $0x400] sm:$0xff]
        %v509 = vld [vmem:[#allocation5 + $0x408] sm:$0xff]
        %v510 = vld [vmem:[#allocation5 + $0x410] sm:$0xff]
        %v511 = vld [vmem:[#allocation5 + $0x418] sm:$0xff]
        %v512 = vld [vmem:[#allocation5 + $0x420] sm:$0xff]
        %v513 = vld [vmem:[#allocation5 + $0x428] sm:$0xff]
        %v514 = vld [vmem:[#allocation5 + $0x430] sm:$0xff]
        %v515 = vld [vmem:[#allocation5 + $0x438] sm:$0xff]
        %v516 = vld [vmem:[#allocation5 + $0x440] sm:$0xff]
        %v517 = vld [vmem:[#allocation5 + $0x448] sm:$0xff]
        %v518 = vld [vmem:[#allocation5 + $0x450] sm:$0xff]
        %v519 = vld [vmem:[#allocation5 + $0x458] sm:$0xff]
        %v520 = vld [vmem:[#allocation5 + $0x460] sm:$0xff]
        %v521 = vld [vmem:[#allocation5 + $0x468] sm:$0xff]
        %v522 = vld [vmem:[#allocation5 + $0x470] sm:$0xff]
        %v523 = vld [vmem:[#allocation5 + $0x478] sm:$0xff]
        %v524 = vld [vmem:[#allocation5 + $0x480] sm:$0xff]
        %v525 = vld [vmem:[#allocation5 + $0x488] sm:$0xff]
        %v526 = vld [vmem:[#allocation5 + $0x490] sm:$0xff]
        %v527 = vld [vmem:[#allocation5 + $0x498] sm:$0xff]
        %v528 = vld [vmem:[#allocation5 + $0x4a0] sm:$0xff]
        %v529 = vld [vmem:[#allocation5 + $0x4a8] sm:$0xff]
        %v530 = vld [vmem:[#allocation5 + $0x4b0] sm:$0xff]
        %v531 = vld [vmem:[#allocation5 + $0x4b8] sm:$0xff]
        %v532 = vld [vmem:[#allocation5 + $0x4c0] sm:$0xff]
        %v533 = vld [vmem:[#allocation5 + $0x4c8] sm:$0xff]
        %v534 = vld [vmem:[#allocation5 + $0x4d0] sm:$0xff]
        %v535 = vld [vmem:[#allocation5 + $0x4d8] sm:$0xff]
        %v536 = vld [vmem:[#allocation5 + $0x4e0] sm:$0xff]
        %v537 = vld [vmem:[#allocation5 + $0x4e8] sm:$0xff]
        %v538 = vld [vmem:[#allocation5 + $0x4f0] sm:$0xff]
        %v539 = vld [vmem:[#allocation5 + $0x4f8] sm:$0xff]
        %v540 = vld [vmem:[#allocation5 + $0x500] sm:$0xff]
        %v541 = vld [vmem:[#allocation5 + $0x508] sm:$0xff]
        %v542 = vld [vmem:[#allocation5 + $0x510] sm:$0xff]
        %v543 = vld [vmem:[#allocation5 + $0x518] sm:$0xff]
        %v544 = vld [vmem:[#allocation5 + $0x520] sm:$0xff]
        %v545 = vld [vmem:[#allocation5 + $0x528] sm:$0xff]
        %v546 = vld [vmem:[#allocation5 + $0x530] sm:$0xff]
        %v547 = vld [vmem:[#allocation5 + $0x538] sm:$0xff]
        %v548 = vld [vmem:[#allocation5 + $0x540] sm:$0xff]
        %v549 = vld [vmem:[#allocation5 + $0x548] sm:$0xff]
        %v550 = vld [vmem:[#allocation5 + $0x550] sm:$0xff]
        %v551 = vld [vmem:[#allocation5 + $0x558] sm:$0xff]
        %v552 = vld [vmem:[#allocation5 + $0x560] sm:$0xff]
        %v553 = vld [vmem:[#allocation5 + $0x568] sm:$0xff]
        %v554 = vld [vmem:[#allocation5 + $0x570] sm:$0xff]
        %v555 = vld [vmem:[#allocation5 + $0x578] sm:$0xff]
        %v556 = vld [vmem:[#allocation5 + $0x580] sm:$0xff]
        %v557 = vld [vmem:[#allocation5 + $0x588] sm:$0xff]
        %v558 = vld [vmem:[#allocation5 + $0x590] sm:$0xff]
        %v559 = vld [vmem:[#allocation5 + $0x598] sm:$0xff]
        %v560 = vld [vmem:[#allocation5 + $0x5a0] sm:$0xff]
        %v561 = vld [vmem:[#allocation5 + $0x5a8] sm:$0xff]
        %v562 = vld [vmem:[#allocation5 + $0x5b0] sm:$0xff]
        %v563 = vld [vmem:[#allocation5 + $0x5b8] sm:$0xff]
        %v564 = vld [vmem:[#allocation5 + $0x5c0] sm:$0xff]
        %v565 = vld [vmem:[#allocation5 + $0x5c8] sm:$0xff]
        %v566 = vld [vmem:[#allocation5 + $0x5d0] sm:$0xff]
        %v567 = vld [vmem:[#allocation5 + $0x5d8] sm:$0xff]
        %v568 = vld [vmem:[#allocation5 + $0x5e0] sm:$0xff]
        %v569 = vld [vmem:[#allocation5 + $0x5e8] sm:$0xff]
        %v570 = vld [vmem:[#allocation5 + $0x5f0] sm:$0xff]
        %v571 = vld [vmem:[#allocation5 + $0x5f8] sm:$0xff]
        %v572 = vld [vmem:[#allocation5 + $0x600] sm:$0xff]
        %v573 = vld [vmem:[#allocation5 + $0x608] sm:$0xff]
        %v574 = vld [vmem:[#allocation5 + $0x610] sm:$0xff]
        %v575 = vld [vmem:[#allocation5 + $0x618] sm:$0xff]
        %v576 = vld [vmem:[#allocation5 + $0x620] sm:$0xff]
        %v577 = vld [vmem:[#allocation5 + $0x628] sm:$0xff]
        %v578 = vld [vmem:[#allocation5 + $0x630] sm:$0xff]
        %v579 = vld [vmem:[#allocation5 + $0x638] sm:$0xff]
        %v580 = vld [vmem:[#allocation5 + $0x640] sm:$0xff]
        %v581 = vld [vmem:[#allocation5 + $0x648] sm:$0xff]
        %v582 = vld [vmem:[#allocation5 + $0x650] sm:$0xff]
        %v583 = vld [vmem:[#allocation5 + $0x658] sm:$0xff]
        %v584 = vld [vmem:[#allocation5 + $0x660] sm:$0xff]
        %v585 = vld [vmem:[#allocation5 + $0x668] sm:$0xff]
        %v586 = vld [vmem:[#allocation5 + $0x670] sm:$0xff]
        %v587 = vld [vmem:[#allocation5 + $0x678] sm:$0xff]
        %v588 = vld [vmem:[#allocation5 + $0x680] sm:$0xff]
        %v589 = vld [vmem:[#allocation5 + $0x688] sm:$0xff]
        %v590 = vld [vmem:[#allocation5 + $0x690] sm:$0xff]
        %v591 = vld [vmem:[#allocation5 + $0x698] sm:$0xff]
        %v592 = vld [vmem:[#allocation5 + $0x6a0] sm:$0xff]
        %v593 = vld [vmem:[#allocation5 + $0x6a8] sm:$0xff]
        %v594 = vld [vmem:[#allocation5 + $0x6b0] sm:$0xff]
        %v595 = vld [vmem:[#allocation5 + $0x6b8] sm:$0xff]
        %v596 = vld [vmem:[#allocation5 + $0x6c0] sm:$0xff]
        %v597 = vld [vmem:[#allocation5 + $0x6c8] sm:$0xff]
        %v598 = vld [vmem:[#allocation5 + $0x6d0] sm:$0xff]
        %v599 = vld [vmem:[#allocation5 + $0x6d8] sm:$0xff]
        %v600 = vld [vmem:[#allocation5 + $0x6e0] sm:$0xff]
        %v601 = vld [vmem:[#allocation5 + $0x6e8] sm:$0xff]
        %v602 = vld [vmem:[#allocation5 + $0x6f0] sm:$0xff]
        %v603 = vld [vmem:[#allocation5 + $0x6f8] sm:$0xff]
        %v604 = vld [vmem:[#allocation5 + $0x700] sm:$0xff]
        %v605 = vld [vmem:[#allocation5 + $0x708] sm:$0xff]
        %v606 = vld [vmem:[#allocation5 + $0x710] sm:$0xff]
        %v607 = vld [vmem:[#allocation5 + $0x718] sm:$0xff]
        %v608 = vld [vmem:[#allocation5 + $0x720] sm:$0xff]
        %v609 = vld [vmem:[#allocation5 + $0x728] sm:$0xff]
        %v610 = vld [vmem:[#allocation5 + $0x730] sm:$0xff]
        %v611 = vld [vmem:[#allocation5 + $0x738] sm:$0xff]
        %v612 = vld [vmem:[#allocation5 + $0x740] sm:$0xff]
        %v613 = vld [vmem:[#allocation5 + $0x748] sm:$0xff]
        %v614 = vld [vmem:[#allocation5 + $0x750] sm:$0xff]
        %v615 = vld [vmem:[#allocation5 + $0x758] sm:$0xff]
        %v616 = vld [vmem:[#allocation5 + $0x760] sm:$0xff]
        %v617 = vld [vmem:[#allocation5 + $0x768] sm:$0xff]
        %v618 = vld [vmem:[#allocation5 + $0x770] sm:$0xff]
        %v619 = vld [vmem:[#allocation5 + $0x778] sm:$0xff]
        %v620 = vld [vmem:[#allocation5 + $0x780] sm:$0xff]
        %v621 = vld [vmem:[#allocation5 + $0x788] sm:$0xff]
        %v622 = vld [vmem:[#allocation5 + $0x790] sm:$0xff]
        %v623 = vld [vmem:[#allocation5 + $0x798] sm:$0xff]
        %v624 = vld [vmem:[#allocation5 + $0x7a0] sm:$0xff]
        %v625 = vld [vmem:[#allocation5 + $0x7a8] sm:$0xff]
        %v626 = vld [vmem:[#allocation5 + $0x7b0] sm:$0xff]
        %v627 = vld [vmem:[#allocation5 + $0x7b8] sm:$0xff]
        %v628 = vld [vmem:[#allocation5 + $0x7c0] sm:$0xff]
        %v629 = vld [vmem:[#allocation5 + $0x7c8] sm:$0xff]
        %v630 = vld [vmem:[#allocation5 + $0x7d0] sm:$0xff]
        %v631 = vld [vmem:[#allocation5 + $0x7d8] sm:$0xff]
        %v632 = vld [vmem:[#allocation5 + $0x7e0] sm:$0xff]
        %v633 = vld [vmem:[#allocation5 + $0x7e8] sm:$0xff]
        %v634 = vld [vmem:[#allocation5 + $0x7f0] sm:$0xff]
        %v635 = vld [vmem:[#allocation5 + $0x7f8] sm:$0xff]
        %v636 = vld [vmem:[#allocation5 + $0x800] sm:$0xff]
        %v637 = vld [vmem:[#allocation5 + $0x808] sm:$0xff]
        %v638 = vld [vmem:[#allocation5 + $0x810] sm:$0xff]
        %v639 = vld [vmem:[#allocation5 + $0x818] sm:$0xff]
        %v640 = vld [vmem:[#allocation5 + $0x820] sm:$0xff]
        %v641 = vld [vmem:[#allocation5 + $0x828] sm:$0xff]
        %v642 = vld [vmem:[#allocation5 + $0x830] sm:$0xff]
        %v643 = vld [vmem:[#allocation5 + $0x838] sm:$0xff]
        %v644 = vld [vmem:[#allocation5 + $0x840] sm:$0xff]
        %v645 = vld [vmem:[#allocation5 + $0x848] sm:$0xff]
        %v646 = vld [vmem:[#allocation5 + $0x850] sm:$0xff]
        %v647 = vld [vmem:[#allocation5 + $0x858] sm:$0xff]
        %v648 = vld [vmem:[#allocation5 + $0x860] sm:$0xff]
        %v649 = vld [vmem:[#allocation5 + $0x868] sm:$0xff]
        %v650 = vld [vmem:[#allocation5 + $0x870] sm:$0xff]
        %v651 = vld [vmem:[#allocation5 + $0x878] sm:$0xff]
        %v652 = vld [vmem:[#allocation5 + $0x880] sm:$0xff]
        %v653 = vld [vmem:[#allocation5 + $0x888] sm:$0xff]
        %v654 = vld [vmem:[#allocation5 + $0x890] sm:$0xff]
        %v655 = vld [vmem:[#allocation5 + $0x898] sm:$0xff]
        %v656 = vld [vmem:[#allocation5 + $0x8a0] sm:$0xff]
        %v657 = vld [vmem:[#allocation5 + $0x8a8] sm:$0xff]
        %v658 = vld [vmem:[#allocation5 + $0x8b0] sm:$0xff]
        %v659 = vld [vmem:[#allocation5 + $0x8b8] sm:$0xff]
        %v660 = vld [vmem:[#allocation5 + $0x8c0] sm:$0xff]
        %v661 = vld [vmem:[#allocation5 + $0x8c8] sm:$0xff]
        %v662 = vld [vmem:[#allocation5 + $0x8d0] sm:$0xff]
        %v663 = vld [vmem:[#allocation5 + $0x8d8] sm:$0xff]
        %v664 = vld [vmem:[#allocation5 + $0x8e0] sm:$0xff]
        %v665 = vld [vmem:[#allocation5 + $0x8e8] sm:$0xff]
        %v666 = vld [vmem:[#allocation5 + $0x8f0] sm:$0xff]
        %v667 = vld [vmem:[#allocation5 + $0x8f8] sm:$0xff]
        %v668 = vld [vmem:[#allocation5 + $0x900] sm:$0xff]
        %v669 = vld [vmem:[#allocation5 + $0x908] sm:$0xff]
        %v670 = vld [vmem:[#allocation5 + $0x910] sm:$0xff]
        %v671 = vld [vmem:[#allocation5 + $0x918] sm:$0xff]
        %v672 = vld [vmem:[#allocation5 + $0x920] sm:$0xff]
        %v673 = vld [vmem:[#allocation5 + $0x928] sm:$0xff]
        %v674 = vld [vmem:[#allocation5 + $0x930] sm:$0xff]
        %v675 = vld [vmem:[#allocation5 + $0x938] sm:$0xff]
        %v676 = vld [vmem:[#allocation5 + $0x940] sm:$0xff]
        %v677 = vld [vmem:[#allocation5 + $0x948] sm:$0xff]
        %v678 = vld [vmem:[#allocation5 + $0x950] sm:$0xff]
        %v679 = vld [vmem:[#allocation5 + $0x958] sm:$0xff]
        %v680 = vld [vmem:[#allocation5 + $0x960] sm:$0xff]
        %v681 = vld [vmem:[#allocation5 + $0x968] sm:$0xff]
        %v682 = vld [vmem:[#allocation5 + $0x970] sm:$0xff]
        %v683 = vld [vmem:[#allocation5 + $0x978] sm:$0xff]
        %v684 = vld [vmem:[#allocation5 + $0x980] sm:$0xff]
        %v685 = vld [vmem:[#allocation5 + $0x988] sm:$0xff]
        %v686 = vld [vmem:[#allocation5 + $0x990] sm:$0xff]
        %v687 = vld [vmem:[#allocation5 + $0x998] sm:$0xff]
        %v688 = vld [vmem:[#allocation5 + $0x9a0] sm:$0xff]
        %v689 = vld [vmem:[#allocation5 + $0x9a8] sm:$0xff]
        %v690 = vld [vmem:[#allocation5 + $0x9b0] sm:$0xff]
        %v691 = vld [vmem:[#allocation5 + $0x9b8] sm:$0xff]
        %v692 = vld [vmem:[#allocation5 + $0x9c0] sm:$0xff]
        %v693 = vld [vmem:[#allocation5 + $0x9c8] sm:$0xff]
        %v694 = vld [vmem:[#allocation5 + $0x9d0] sm:$0xff]
        %v695 = vld [vmem:[#allocation5 + $0x9d8] sm:$0xff]
        %v696 = vld [vmem:[#allocation5 + $0x9e0] sm:$0xff]
        %v697 = vld [vmem:[#allocation5 + $0x9e8] sm:$0xff]
        %v698 = vld [vmem:[#allocation5 + $0x9f0] sm:$0xff]
        %v699 = vld [vmem:[#allocation5 + $0x9f8] sm:$0xff]
        %v700 = vld [vmem:[#allocation5 + $0xa00] sm:$0xff]
        %v701 = vld [vmem:[#allocation5 + $0xa08] sm:$0xff]
        %v702 = vld [vmem:[#allocation5 + $0xa10] sm:$0xff]
        %v703 = vld [vmem:[#allocation5 + $0xa18] sm:$0xff]
        %v704 = vld [vmem:[#allocation5 + $0xa20] sm:$0xff]
        %v705 = vld [vmem:[#allocation5 + $0xa28] sm:$0xff]
        %v706 = vld [vmem:[#allocation5 + $0xa30] sm:$0xff]
        %v707 = vld [vmem:[#allocation5 + $0xa38] sm:$0xff]
        %v708 = vld [vmem:[#allocation5 + $0xa40] sm:$0xff]
        %v709 = vld [vmem:[#allocation5 + $0xa48] sm:$0xff]
        %v710 = vld [vmem:[#allocation5 + $0xa50] sm:$0xff]
        %v711 = vld [vmem:[#allocation5 + $0xa58] sm:$0xff]
        %v712 = vld [vmem:[#allocation5 + $0xa60] sm:$0xff]
        %v713 = vld [vmem:[#allocation5 + $0xa68] sm:$0xff]
        %v714 = vld [vmem:[#allocation5 + $0xa70] sm:$0xff]
        %v715 = vld [vmem:[#allocation5 + $0xa78] sm:$0xff]
        %v716 = vld [vmem:[#allocation5 + $0xa80] sm:$0xff]
        %v717 = vld [vmem:[#allocation5 + $0xa88] sm:$0xff]
        %v718 = vld [vmem:[#allocation5 + $0xa90] sm:$0xff]
        %v719 = vld [vmem:[#allocation5 + $0xa98] sm:$0xff]
        %v720 = vld [vmem:[#allocation5 + $0xaa0] sm:$0xff]
        %v721 = vld [vmem:[#allocation5 + $0xaa8] sm:$0xff]
        %v722 = vld [vmem:[#allocation5 + $0xab0] sm:$0xff]
        %v723 = vld [vmem:[#allocation5 + $0xab8] sm:$0xff]
        %v724 = vld [vmem:[#allocation5 + $0xac0] sm:$0xff]
        %v725 = vld [vmem:[#allocation5 + $0xac8] sm:$0xff]
        %v726 = vld [vmem:[#allocation5 + $0xad0] sm:$0xff]
        %v727 = vld [vmem:[#allocation5 + $0xad8] sm:$0xff]
        %v728 = vld [vmem:[#allocation5 + $0xae0] sm:$0xff]
        %v729 = vld [vmem:[#allocation5 + $0xae8] sm:$0xff]
        %v730 = vld [vmem:[#allocation5 + $0xaf0] sm:$0xff]
        %v731 = vld [vmem:[#allocation5 + $0xaf8] sm:$0xff]
        %v732 = vld [vmem:[#allocation5 + $0xb00] sm:$0xff]
        %v733 = vld [vmem:[#allocation5 + $0xb08] sm:$0xff]
        %v734 = vld [vmem:[#allocation5 + $0xb10] sm:$0xff]
        %v735 = vld [vmem:[#allocation5 + $0xb18] sm:$0xff]
        %v736 = vld [vmem:[#allocation5 + $0xb20] sm:$0xff]
        %v737 = vld [vmem:[#allocation5 + $0xb28] sm:$0xff]
        %v738 = vld [vmem:[#allocation5 + $0xb30] sm:$0xff]
        %v739 = vld [vmem:[#allocation5 + $0xb38] sm:$0xff]
        %v740 = vld [vmem:[#allocation5 + $0xb40] sm:$0xff]
        %v741 = vld [vmem:[#allocation5 + $0xb48] sm:$0xff]
        %v742 = vld [vmem:[#allocation5 + $0xb50] sm:$0xff]
        %v743 = vld [vmem:[#allocation5 + $0xb58] sm:$0xff]
        %v744 = vld [vmem:[#allocation5 + $0xb60] sm:$0xff]
        %v745 = vld [vmem:[#allocation5 + $0xb68] sm:$0xff]
        %v746 = vld [vmem:[#allocation5 + $0xb70] sm:$0xff]
        %v747 = vld [vmem:[#allocation5 + $0xb78] sm:$0xff]
        %v748 = vld [vmem:[#allocation5 + $0xb80] sm:$0xff]
        %v749 = vld [vmem:[#allocation5 + $0xb88] sm:$0xff]
        %v750 = vld [vmem:[#allocation5 + $0xb90] sm:$0xff]
        %v751 = vld [vmem:[#allocation5 + $0xb98] sm:$0xff]
        %v752 = vld [vmem:[#allocation5 + $0xba0] sm:$0xff]
        %v753 = vld [vmem:[#allocation5 + $0xba8] sm:$0xff]
        %v754 = vld [vmem:[#allocation5 + $0xbb0] sm:$0xff]
        %v755 = vld [vmem:[#allocation5 + $0xbb8] sm:$0xff]
        %v756 = vld [vmem:[#allocation5 + $0xbc0] sm:$0xff]
        %v757 = vld [vmem:[#allocation5 + $0xbc8] sm:$0xff]
        %v758 = vld [vmem:[#allocation5 + $0xbd0] sm:$0xff]
        %v759 = vld [vmem:[#allocation5 + $0xbd8] sm:$0xff]
        %v760 = vld [vmem:[#allocation5 + $0xbe0] sm:$0xff]
        %v761 = vld [vmem:[#allocation5 + $0xbe8] sm:$0xff]
        %v762 = vld [vmem:[#allocation5 + $0xbf0] sm:$0xff]
        %v763 = vld [vmem:[#allocation5 + $0xbf8] sm:$0xff]
        %v764 = vld [vmem:[#allocation5 + $0xc00] sm:$0xff]
        %v765 = vld [vmem:[#allocation5 + $0xc08] sm:$0xff]
        %v766 = vld [vmem:[#allocation5 + $0xc10] sm:$0xff]
        %v767 = vld [vmem:[#allocation5 + $0xc18] sm:$0xff]
        %v768 = vld [vmem:[#allocation5 + $0xc20] sm:$0xff]
        %v769 = vld [vmem:[#allocation5 + $0xc28] sm:$0xff]
        %v770 = vld [vmem:[#allocation5 + $0xc30] sm:$0xff]
        %v771 = vld [vmem:[#allocation5 + $0xc38] sm:$0xff]
        %v772 = vld [vmem:[#allocation7] sm:$0xf]
        %v774 = vperm.slane %v772, 0
        %v775 = vperm.slane %v772, 1
        %v776 = vperm.slane %v772, 2
        %v777 = vperm.slane %v772, 3
        %vm782 = vcmask 130048
        %v784 = vsel %vm782, %v358, 0
        %v787 = vsel %vm782, %v365, 0
        %v790 = vsel %vm782, %v372, 0
        %v793 = vsel %vm782, %v379, 0
        %795 = vmatpush.msra.mxu0 %v440
        %796 = vmatpush.msra.mxu0 %v436
        %797 = vmatpush.msra.mxu0 %v432
        %798 = vmatpush.msra.mxu0 %v428
        %799 = vmatpush.msra.mxu0 %v424
        %800 = vmatpush.msra.mxu0 %v420
        %801 = vmatpush.msra.mxu0 %v416
        %802 = vmatpush.msra.mxu0 %v412
        %803 = vmatpush.msra.mxu0 %v408
        %804 = vmatpush.msra.mxu0 %v404
        %805 = vmatpush.msra.mxu0 %v400
        %806 = vmatpush.msra.mxu0 %v396
        %807 = vmatpush.msra.mxu0 %v392
        %808 = vmatpush.msra.mxu0 %v388
        %809 = vmatpush.msra.mxu0 %v384
        %810 = vmatpush.msra.mxu0 %v380
        %811 = vmatmul.f32.gmra.mxu0 %v352
        %v812 = vpop.f32.mrf.mxu0
        %v813 = vadd.f32 %v774, %v812
        %814 = vmatmul.f32.gmra.mxu0 %v359
        %v815 = vpop.f32.mrf.mxu0
        %v816 = vadd.f32 %v774, %v815
        %817 = vmatmul.f32.gmra.mxu0 %v366
        %v818 = vpop.f32.mrf.mxu0
        %v819 = vadd.f32 %v774, %v818
        %820 = vmatmul.f32.gmra.mxu0 %v373
        %v821 = vpop.f32.mrf.mxu0
        %v822 = vadd.f32 %v774, %v821
        %823 = vdwg.mxu0
        %824 = vmatpush.msra.mxu0 %v504
        %825 = vmatpush.msra.mxu0 %v500
        %826 = vmatpush.msra.mxu0 %v496
        %827 = vmatpush.msra.mxu0 %v492
        %828 = vmatpush.msra.mxu0 %v488
        %829 = vmatpush.msra.mxu0 %v484
        %830 = vmatpush.msra.mxu0 %v480
        %831 = vmatpush.msra.mxu0 %v476
        %832 = vmatpush.msra.mxu0 %v472
        %833 = vmatpush.msra.mxu0 %v468
        %834 = vmatpush.msra.mxu0 %v464
        %835 = vmatpush.msra.mxu0 %v460
        %836 = vmatpush.msra.mxu0 %v456
        %837 = vmatpush.msra.mxu0 %v452
        %838 = vmatpush.msra.mxu0 %v448
        %839 = vmatpush.msra.mxu0 %v444
        %840 = vmatmul.f32.gmra.mxu0 %v353
        %v841 = vpop.f32.mrf.mxu0
        %v842 = vadd.f32 %v813, %v841
        %843 = vmatmul.f32.gmra.mxu0 %v360
        %v844 = vpop.f32.mrf.mxu0
        %v845 = vadd.f32 %v816, %v844
        %846 = vmatmul.f32.gmra.mxu0 %v367
        %v847 = vpop.f32.mrf.mxu0
        %v848 = vadd.f32 %v819, %v847
        %849 = vmatmul.f32.gmra.mxu0 %v374
        %v850 = vpop.f32.mrf.mxu0
        %v851 = vadd.f32 %v822, %v850
        %852 = vdwg.mxu0
        %853 = vmatpush.msra.mxu0 %v568
        %854 = vmatpush.msra.mxu0 %v564
        %855 = vmatpush.msra.mxu0 %v560
        %856 = vmatpush.msra.mxu0 %v556
        %857 = vmatpush.msra.mxu0 %v552
        %858 = vmatpush.msra.mxu0 %v548
        %859 = vmatpush.msra.mxu0 %v544
        %860 = vmatpush.msra.mxu0 %v540
        %861 = vmatpush.msra.mxu0 %v536
        %862 = vmatpush.msra.mxu0 %v532
        %863 = vmatpush.msra.mxu0 %v528
        %864 = vmatpush.msra.mxu0 %v524
        %865 = vmatpush.msra.mxu0 %v520
        %866 = vmatpush.msra.mxu0 %v516
        %867 = vmatpush.msra.mxu0 %v512
        %868 = vmatpush.msra.mxu0 %v508
        %869 = vmatmul.f32.gmra.mxu0 %v354
        %v870 = vpop.f32.mrf.mxu0
        %v871 = vadd.f32 %v842, %v870
        %872 = vmatmul.f32.gmra.mxu0 %v361
        %v873 = vpop.f32.mrf.mxu0
        %v874 = vadd.f32 %v845, %v873
        %875 = vmatmul.f32.gmra.mxu0 %v368
        %v876 = vpop.f32.mrf.mxu0
        %v877 = vadd.f32 %v848, %v876
        %878 = vmatmul.f32.gmra.mxu0 %v375
        %v879 = vpop.f32.mrf.mxu0
        %v880 = vadd.f32 %v851, %v879
        %881 = vdwg.mxu0
        %882 = vmatpush.msra.mxu0 %v632
        %883 = vmatpush.msra.mxu0 %v628
        %884 = vmatpush.msra.mxu0 %v624
        %885 = vmatpush.msra.mxu0 %v620
        %886 = vmatpush.msra.mxu0 %v616
        %887 = vmatpush.msra.mxu0 %v612
        %888 = vmatpush.msra.mxu0 %v608
        %889 = vmatpush.msra.mxu0 %v604
        %890 = vmatpush.msra.mxu0 %v600
        %891 = vmatpush.msra.mxu0 %v596
        %892 = vmatpush.msra.mxu0 %v592
        %893 = vmatpush.msra.mxu0 %v588
        %894 = vmatpush.msra.mxu0 %v584
        %895 = vmatpush.msra.mxu0 %v580
        %896 = vmatpush.msra.mxu0 %v576
        %897 = vmatpush.msra.mxu0 %v572
        %898 = vmatmul.f32.gmra.mxu0 %v355
        %v899 = vpop.f32.mrf.mxu0
        %v900 = vadd.f32 %v871, %v899
        %901 = vmatmul.f32.gmra.mxu0 %v362
        %v902 = vpop.f32.mrf.mxu0
        %v903 = vadd.f32 %v874, %v902
        %904 = vmatmul.f32.gmra.mxu0 %v369
        %v905 = vpop.f32.mrf.mxu0
        %v906 = vadd.f32 %v877, %v905
        %907 = vmatmul.f32.gmra.mxu0 %v376
        %v908 = vpop.f32.mrf.mxu0
        %v909 = vadd.f32 %v880, %v908
        %910 = vdwg.mxu0
        %911 = vmatpush.msra.mxu0 %v696
        %912 = vmatpush.msra.mxu0 %v692
        %913 = vmatpush.msra.mxu0 %v688
        %914 = vmatpush.msra.mxu0 %v684
        %915 = vmatpush.msra.mxu0 %v680
        %916 = vmatpush.msra.mxu0 %v676
        %917 = vmatpush.msra.mxu0 %v672
        %918 = vmatpush.msra.mxu0 %v668
        %919 = vmatpush.msra.mxu0 %v664
        %920 = vmatpush.msra.mxu0 %v660
        %921 = vmatpush.msra.mxu0 %v656
        %922 = vmatpush.msra.mxu0 %v652
        %923 = vmatpush.msra.mxu0 %v648
        %924 = vmatpush.msra.mxu0 %v644
        %925 = vmatpush.msra.mxu0 %v640
        %926 = vmatpush.msra.mxu0 %v636
        %927 = vmatmul.f32.gmra.mxu0 %v356
        %v928 = vpop.f32.mrf.mxu0
        %v929 = vadd.f32 %v900, %v928
        %930 = vmatmul.f32.gmra.mxu0 %v363
        %v931 = vpop.f32.mrf.mxu0
        %v932 = vadd.f32 %v903, %v931
        %933 = vmatmul.f32.gmra.mxu0 %v370
        %v934 = vpop.f32.mrf.mxu0
        %v935 = vadd.f32 %v906, %v934
        %936 = vmatmul.f32.gmra.mxu0 %v377
        %v937 = vpop.f32.mrf.mxu0
        %v938 = vadd.f32 %v909, %v937
        %939 = vdwg.mxu0
        %940 = vmatpush.msra.mxu0 %v760
        %941 = vmatpush.msra.mxu0 %v756
        %942 = vmatpush.msra.mxu0 %v752
        %943 = vmatpush.msra.mxu0 %v748
        %944 = vmatpush.msra.mxu0 %v744
        %945 = vmatpush.msra.mxu0 %v740
        %946 = vmatpush.msra.mxu0 %v736
        %947 = vmatpush.msra.mxu0 %v732
        %948 = vmatpush.msra.mxu0 %v728
        %949 = vmatpush.msra.mxu0 %v724
        %950 = vmatpush.msra.mxu0 %v720
        %951 = vmatpush.msra.mxu0 %v716
        %952 = vmatpush.msra.mxu0 %v712
        %953 = vmatpush.msra.mxu0 %v708
        %954 = vmatpush.msra.mxu0 %v704
        %955 = vmatpush.msra.mxu0 %v700
        %956 = vmatmul.f32.gmra.mxu0 %v357
        %v957 = vpop.f32.mrf.mxu0
        %v958 = vadd.f32 %v929, %v957
        %959 = vmatmul.f32.gmra.mxu0 %v364
        %v960 = vpop.f32.mrf.mxu0
        %v961 = vadd.f32 %v932, %v960
        %962 = vmatmul.f32.gmra.mxu0 %v371
        %v963 = vpop.f32.mrf.mxu0
        %v964 = vadd.f32 %v935, %v963
        %965 = vmatmul.f32.gmra.mxu0 %v378
        %v966 = vpop.f32.mrf.mxu0
        %v967 = vadd.f32 %v938, %v966
        %968 = vdwg.mxu0
        %969 = vmatpush.msra.mxu0 0.0
        %970 = vmatpush.msra.mxu0 0.0
        %971 = vmatpush.msra.mxu0 0.0
        %972 = vmatpush.msra.mxu0 0.0
        %973 = vmatpush.msra.mxu0 0.0
        %974 = vmatpush.msra.mxu0 0.0
        %975 = vmatpush.msra.mxu0 0.0
        %976 = vmatpush.msra.mxu0 0.0
        %977 = vmatpush.msra.mxu0 0.0
        %978 = vmatpush.msra.mxu0 0.0
        %979 = vmatpush.msra.mxu0 0.0
        %980 = vmatpush.msra.mxu0 0.0
        %981 = vmatpush.msra.mxu0 0.0
        %982 = vmatpush.msra.mxu0 0.0
        %983 = vmatpush.msra.mxu0 %v768
        %984 = vmatpush.msra.mxu0 %v764
        %985 = vmatmul.f32.gmra.mxu0 %v784
        %v986 = vpop.f32.mrf.mxu0
        %v987 = vadd.f32 %v958, %v986
        %988 = vmatmul.f32.gmra.mxu0 %v787
        %v989 = vpop.f32.mrf.mxu0
        %v990 = vadd.f32 %v961, %v989
        %991 = vmatmul.f32.gmra.mxu0 %v790
        %v992 = vpop.f32.mrf.mxu0
        %v993 = vadd.f32 %v964, %v992
        %994 = vmatmul.f32.gmra.mxu0 %v793
        %v995 = vpop.f32.mrf.mxu0
        %v996 = vadd.f32 %v967, %v995
        %997 = vdwg.mxu0
        %998 = vmatpush.msra.mxu0 %v441
        %999 = vmatpush.msra.mxu0 %v437
        %1000 = vmatpush.msra.mxu0 %v433
        %1001 = vmatpush.msra.mxu0 %v429
        %1002 = vmatpush.msra.mxu0 %v425
        %1003 = vmatpush.msra.mxu0 %v421
        %1004 = vmatpush.msra.mxu0 %v417
        %1005 = vmatpush.msra.mxu0 %v413
        %1006 = vmatpush.msra.mxu0 %v409
        %1007 = vmatpush.msra.mxu0 %v405
        %1008 = vmatpush.msra.mxu0 %v401
        %1009 = vmatpush.msra.mxu0 %v397
        %1010 = vmatpush.msra.mxu0 %v393
        %1011 = vmatpush.msra.mxu0 %v389
        %1012 = vmatpush.msra.mxu0 %v385
        %1013 = vmatpush.msra.mxu0 %v381
        %1014 = vmatmul.f32.gmra.mxu0 %v352
        %v1015 = vpop.f32.mrf.mxu0
        %v1016 = vadd.f32 %v775, %v1015
        %1017 = vmatmul.f32.gmra.mxu0 %v359
        %v1018 = vpop.f32.mrf.mxu0
        %v1019 = vadd.f32 %v775, %v1018
        %1020 = vmatmul.f32.gmra.mxu0 %v366
        %v1021 = vpop.f32.mrf.mxu0
        %v1022 = vadd.f32 %v775, %v1021
        %1023 = vmatmul.f32.gmra.mxu0 %v373
        %v1024 = vpop.f32.mrf.mxu0
        %v1025 = vadd.f32 %v775, %v1024
        %1026 = vdwg.mxu0
        %1027 = vmatpush.msra.mxu0 %v505
        %1028 = vmatpush.msra.mxu0 %v501
        %1029 = vmatpush.msra.mxu0 %v497
        %1030 = vmatpush.msra.mxu0 %v493
        %1031 = vmatpush.msra.mxu0 %v489
        %1032 = vmatpush.msra.mxu0 %v485
        %1033 = vmatpush.msra.mxu0 %v481
        %1034 = vmatpush.msra.mxu0 %v477
        %1035 = vmatpush.msra.mxu0 %v473
        %1036 = vmatpush.msra.mxu0 %v469
        %1037 = vmatpush.msra.mxu0 %v465
        %1038 = vmatpush.msra.mxu0 %v461
        %1039 = vmatpush.msra.mxu0 %v457
        %1040 = vmatpush.msra.mxu0 %v453
        %1041 = vmatpush.msra.mxu0 %v449
        %1042 = vmatpush.msra.mxu0 %v445
        %1043 = vmatmul.f32.gmra.mxu0 %v353
        %v1044 = vpop.f32.mrf.mxu0
        %v1045 = vadd.f32 %v1016, %v1044
        %1046 = vmatmul.f32.gmra.mxu0 %v360
        %v1047 = vpop.f32.mrf.mxu0
        %v1048 = vadd.f32 %v1019, %v1047
        %1049 = vmatmul.f32.gmra.mxu0 %v367
        %v1050 = vpop.f32.mrf.mxu0
        %v1051 = vadd.f32 %v1022, %v1050
        %1052 = vmatmul.f32.gmra.mxu0 %v374
        %v1053 = vpop.f32.mrf.mxu0
        %v1054 = vadd.f32 %v1025, %v1053
        %1055 = vdwg.mxu0
        %1056 = vmatpush.msra.mxu0 %v569
        %1057 = vmatpush.msra.mxu0 %v565
        %1058 = vmatpush.msra.mxu0 %v561
        %1059 = vmatpush.msra.mxu0 %v557
        %1060 = vmatpush.msra.mxu0 %v553
        %1061 = vmatpush.msra.mxu0 %v549
        %1062 = vmatpush.msra.mxu0 %v545
        %1063 = vmatpush.msra.mxu0 %v541
        %1064 = vmatpush.msra.mxu0 %v537
        %1065 = vmatpush.msra.mxu0 %v533
        %1066 = vmatpush.msra.mxu0 %v529
        %1067 = vmatpush.msra.mxu0 %v525
        %1068 = vmatpush.msra.mxu0 %v521
        %1069 = vmatpush.msra.mxu0 %v517
        %1070 = vmatpush.msra.mxu0 %v513
        %1071 = vmatpush.msra.mxu0 %v509
        %1072 = vmatmul.f32.gmra.mxu0 %v354
        %v1073 = vpop.f32.mrf.mxu0
        %v1074 = vadd.f32 %v1045, %v1073
        %1075 = vmatmul.f32.gmra.mxu0 %v361
        %v1076 = vpop.f32.mrf.mxu0
        %v1077 = vadd.f32 %v1048, %v1076
        %1078 = vmatmul.f32.gmra.mxu0 %v368
        %v1079 = vpop.f32.mrf.mxu0
        %v1080 = vadd.f32 %v1051, %v1079
        %1081 = vmatmul.f32.gmra.mxu0 %v375
        %v1082 = vpop.f32.mrf.mxu0
        %v1083 = vadd.f32 %v1054, %v1082
        %1084 = vdwg.mxu0
        %1085 = vmatpush.msra.mxu0 %v633
        %1086 = vmatpush.msra.mxu0 %v629
        %1087 = vmatpush.msra.mxu0 %v625
        %1088 = vmatpush.msra.mxu0 %v621
        %1089 = vmatpush.msra.mxu0 %v617
        %1090 = vmatpush.msra.mxu0 %v613
        %1091 = vmatpush.msra.mxu0 %v609
        %1092 = vmatpush.msra.mxu0 %v605
        %1093 = vmatpush.msra.mxu0 %v601
        %1094 = vmatpush.msra.mxu0 %v597
        %1095 = vmatpush.msra.mxu0 %v593
        %1096 = vmatpush.msra.mxu0 %v589
        %1097 = vmatpush.msra.mxu0 %v585
        %1098 = vmatpush.msra.mxu0 %v581
        %1099 = vmatpush.msra.mxu0 %v577
        %1100 = vmatpush.msra.mxu0 %v573
        %1101 = vmatmul.f32.gmra.mxu0 %v355
        %v1102 = vpop.f32.mrf.mxu0
        %v1103 = vadd.f32 %v1074, %v1102
        %1104 = vmatmul.f32.gmra.mxu0 %v362
        %v1105 = vpop.f32.mrf.mxu0
        %v1106 = vadd.f32 %v1077, %v1105
        %1107 = vmatmul.f32.gmra.mxu0 %v369
        %v1108 = vpop.f32.mrf.mxu0
        %v1109 = vadd.f32 %v1080, %v1108
        %1110 = vmatmul.f32.gmra.mxu0 %v376
        %v1111 = vpop.f32.mrf.mxu0
        %v1112 = vadd.f32 %v1083, %v1111
        %1113 = vdwg.mxu0
        %1114 = vmatpush.msra.mxu0 %v697
        %1115 = vmatpush.msra.mxu0 %v693
        %1116 = vmatpush.msra.mxu0 %v689
        %1117 = vmatpush.msra.mxu0 %v685
        %1118 = vmatpush.msra.mxu0 %v681
        %1119 = vmatpush.msra.mxu0 %v677
        %1120 = vmatpush.msra.mxu0 %v673
        %1121 = vmatpush.msra.mxu0 %v669
        %1122 = vmatpush.msra.mxu0 %v665
        %1123 = vmatpush.msra.mxu0 %v661
        %1124 = vmatpush.msra.mxu0 %v657
        %1125 = vmatpush.msra.mxu0 %v653
        %1126 = vmatpush.msra.mxu0 %v649
        %1127 = vmatpush.msra.mxu0 %v645
        %1128 = vmatpush.msra.mxu0 %v641
        %1129 = vmatpush.msra.mxu0 %v637
        %1130 = vmatmul.f32.gmra.mxu0 %v356
        %v1131 = vpop.f32.mrf.mxu0
        %v1132 = vadd.f32 %v1103, %v1131
        %1133 = vmatmul.f32.gmra.mxu0 %v363
        %v1134 = vpop.f32.mrf.mxu0
        %v1135 = vadd.f32 %v1106, %v1134
        %1136 = vmatmul.f32.gmra.mxu0 %v370
        %v1137 = vpop.f32.mrf.mxu0
        %v1138 = vadd.f32 %v1109, %v1137
        %1139 = vmatmul.f32.gmra.mxu0 %v377
        %v1140 = vpop.f32.mrf.mxu0
        %v1141 = vadd.f32 %v1112, %v1140
        %1142 = vdwg.mxu0
        %1143 = vmatpush.msra.mxu0 %v761
        %1144 = vmatpush.msra.mxu0 %v757
        %1145 = vmatpush.msra.mxu0 %v753
        %1146 = vmatpush.msra.mxu0 %v749
        %1147 = vmatpush.msra.mxu0 %v745
        %1148 = vmatpush.msra.mxu0 %v741
        %1149 = vmatpush.msra.mxu0 %v737
        %1150 = vmatpush.msra.mxu0 %v733
        %1151 = vmatpush.msra.mxu0 %v729
        %1152 = vmatpush.msra.mxu0 %v725
        %1153 = vmatpush.msra.mxu0 %v721
        %1154 = vmatpush.msra.mxu0 %v717
        %1155 = vmatpush.msra.mxu0 %v713
        %1156 = vmatpush.msra.mxu0 %v709
        %1157 = vmatpush.msra.mxu0 %v705
        %1158 = vmatpush.msra.mxu0 %v701
        %1159 = vmatmul.f32.gmra.mxu0 %v357
        %v1160 = vpop.f32.mrf.mxu0
        %v1161 = vadd.f32 %v1132, %v1160
        %1162 = vmatmul.f32.gmra.mxu0 %v364
        %v1163 = vpop.f32.mrf.mxu0
        %v1164 = vadd.f32 %v1135, %v1163
        %1165 = vmatmul.f32.gmra.mxu0 %v371
        %v1166 = vpop.f32.mrf.mxu0
        %v1167 = vadd.f32 %v1138, %v1166
        %1168 = vmatmul.f32.gmra.mxu0 %v378
        %v1169 = vpop.f32.mrf.mxu0
        %v1170 = vadd.f32 %v1141, %v1169
        %1171 = vdwg.mxu0
        %1172 = vmatpush.msra.mxu0 0.0
        %1173 = vmatpush.msra.mxu0 0.0
        %1174 = vmatpush.msra.mxu0 0.0
        %1175 = vmatpush.msra.mxu0 0.0
        %1176 = vmatpush.msra.mxu0 0.0
        %1177 = vmatpush.msra.mxu0 0.0
        %1178 = vmatpush.msra.mxu0 0.0
        %1179 = vmatpush.msra.mxu0 0.0
        %1180 = vmatpush.msra.mxu0 0.0
        %1181 = vmatpush.msra.mxu0 0.0
        %1182 = vmatpush.msra.mxu0 0.0
        %1183 = vmatpush.msra.mxu0 0.0
        %1184 = vmatpush.msra.mxu0 0.0
        %1185 = vmatpush.msra.mxu0 0.0
        %1186 = vmatpush.msra.mxu0 %v769
        %1187 = vmatpush.msra.mxu0 %v765
        %1188 = vmatmul.f32.gmra.mxu0 %v784
        %v1189 = vpop.f32.mrf.mxu0
        %v1190 = vadd.f32 %v1161, %v1189
        %1191 = vmatmul.f32.gmra.mxu0 %v787
        %v1192 = vpop.f32.mrf.mxu0
        %v1193 = vadd.f32 %v1164, %v1192
        %1194 = vmatmul.f32.gmra.mxu0 %v790
        %v1195 = vpop.f32.mrf.mxu0
        %v1196 = vadd.f32 %v1167, %v1195
        %1197 = vmatmul.f32.gmra.mxu0 %v793
        %v1198 = vpop.f32.mrf.mxu0
        %v1199 = vadd.f32 %v1170, %v1198
        %1200 = vdwg.mxu0
        %1201 = vmatpush.msra.mxu0 %v442
        %1202 = vmatpush.msra.mxu0 %v438
        %1203 = vmatpush.msra.mxu0 %v434
        %1204 = vmatpush.msra.mxu0 %v430
        %1205 = vmatpush.msra.mxu0 %v426
        %1206 = vmatpush.msra.mxu0 %v422
        %1207 = vmatpush.msra.mxu0 %v418
        %1208 = vmatpush.msra.mxu0 %v414
        %1209 = vmatpush.msra.mxu0 %v410
        %1210 = vmatpush.msra.mxu0 %v406
        %1211 = vmatpush.msra.mxu0 %v402
        %1212 = vmatpush.msra.mxu0 %v398
        %1213 = vmatpush.msra.mxu0 %v394
        %1214 = vmatpush.msra.mxu0 %v390
        %1215 = vmatpush.msra.mxu0 %v386
        %1216 = vmatpush.msra.mxu0 %v382
        %1217 = vmatmul.f32.gmra.mxu0 %v352
        %v1218 = vpop.f32.mrf.mxu0
        %v1219 = vadd.f32 %v776, %v1218
        %1220 = vmatmul.f32.gmra.mxu0 %v359
        %v1221 = vpop.f32.mrf.mxu0
        %v1222 = vadd.f32 %v776, %v1221
        %1223 = vmatmul.f32.gmra.mxu0 %v366
        %v1224 = vpop.f32.mrf.mxu0
        %v1225 = vadd.f32 %v776, %v1224
        %1226 = vmatmul.f32.gmra.mxu0 %v373
        %v1227 = vpop.f32.mrf.mxu0
        %v1228 = vadd.f32 %v776, %v1227
        %1229 = vdwg.mxu0
        %1230 = vmatpush.msra.mxu0 %v506
        %1231 = vmatpush.msra.mxu0 %v502
        %1232 = vmatpush.msra.mxu0 %v498
        %1233 = vmatpush.msra.mxu0 %v494
        %1234 = vmatpush.msra.mxu0 %v490
        %1235 = vmatpush.msra.mxu0 %v486
        %1236 = vmatpush.msra.mxu0 %v482
        %1237 = vmatpush.msra.mxu0 %v478
        %1238 = vmatpush.msra.mxu0 %v474
        %1239 = vmatpush.msra.mxu0 %v470
        %1240 = vmatpush.msra.mxu0 %v466
        %1241 = vmatpush.msra.mxu0 %v462
        %1242 = vmatpush.msra.mxu0 %v458
        %1243 = vmatpush.msra.mxu0 %v454
        %1244 = vmatpush.msra.mxu0 %v450
        %1245 = vmatpush.msra.mxu0 %v446
        %1246 = vmatmul.f32.gmra.mxu0 %v353
        %v1247 = vpop.f32.mrf.mxu0
        %v1248 = vadd.f32 %v1219, %v1247
        %1249 = vmatmul.f32.gmra.mxu0 %v360
        %v1250 = vpop.f32.mrf.mxu0
        %v1251 = vadd.f32 %v1222, %v1250
        %1252 = vmatmul.f32.gmra.mxu0 %v367
        %v1253 = vpop.f32.mrf.mxu0
        %v1254 = vadd.f32 %v1225, %v1253
        %1255 = vmatmul.f32.gmra.mxu0 %v374
        %v1256 = vpop.f32.mrf.mxu0
        %v1257 = vadd.f32 %v1228, %v1256
        %1258 = vdwg.mxu0
        %1259 = vmatpush.msra.mxu0 %v570
        %1260 = vmatpush.msra.mxu0 %v566
        %1261 = vmatpush.msra.mxu0 %v562
        %1262 = vmatpush.msra.mxu0 %v558
        %1263 = vmatpush.msra.mxu0 %v554
        %1264 = vmatpush.msra.mxu0 %v550
        %1265 = vmatpush.msra.mxu0 %v546
        %1266 = vmatpush.msra.mxu0 %v542
        %1267 = vmatpush.msra.mxu0 %v538
        %1268 = vmatpush.msra.mxu0 %v534
        %1269 = vmatpush.msra.mxu0 %v530
        %1270 = vmatpush.msra.mxu0 %v526
        %1271 = vmatpush.msra.mxu0 %v522
        %1272 = vmatpush.msra.mxu0 %v518
        %1273 = vmatpush.msra.mxu0 %v514
        %1274 = vmatpush.msra.mxu0 %v510
        %1275 = vmatmul.f32.gmra.mxu0 %v354
        %v1276 = vpop.f32.mrf.mxu0
        %v1277 = vadd.f32 %v1248, %v1276
        %1278 = vmatmul.f32.gmra.mxu0 %v361
        %v1279 = vpop.f32.mrf.mxu0
        %v1280 = vadd.f32 %v1251, %v1279
        %1281 = vmatmul.f32.gmra.mxu0 %v368
        %v1282 = vpop.f32.mrf.mxu0
        %v1283 = vadd.f32 %v1254, %v1282
        %1284 = vmatmul.f32.gmra.mxu0 %v375
        %v1285 = vpop.f32.mrf.mxu0
        %v1286 = vadd.f32 %v1257, %v1285
        %1287 = vdwg.mxu0
        %1288 = vmatpush.msra.mxu0 %v634
        %1289 = vmatpush.msra.mxu0 %v630
        %1290 = vmatpush.msra.mxu0 %v626
        %1291 = vmatpush.msra.mxu0 %v622
        %1292 = vmatpush.msra.mxu0 %v618
        %1293 = vmatpush.msra.mxu0 %v614
        %1294 = vmatpush.msra.mxu0 %v610
        %1295 = vmatpush.msra.mxu0 %v606
        %1296 = vmatpush.msra.mxu0 %v602
        %1297 = vmatpush.msra.mxu0 %v598
        %1298 = vmatpush.msra.mxu0 %v594
        %1299 = vmatpush.msra.mxu0 %v590
        %1300 = vmatpush.msra.mxu0 %v586
        %1301 = vmatpush.msra.mxu0 %v582
        %1302 = vmatpush.msra.mxu0 %v578
        %1303 = vmatpush.msra.mxu0 %v574
        %1304 = vmatmul.f32.gmra.mxu0 %v355
        %v1305 = vpop.f32.mrf.mxu0
        %v1306 = vadd.f32 %v1277, %v1305
        %1307 = vmatmul.f32.gmra.mxu0 %v362
        %v1308 = vpop.f32.mrf.mxu0
        %v1309 = vadd.f32 %v1280, %v1308
        %1310 = vmatmul.f32.gmra.mxu0 %v369
        %v1311 = vpop.f32.mrf.mxu0
        %v1312 = vadd.f32 %v1283, %v1311
        %1313 = vmatmul.f32.gmra.mxu0 %v376
        %v1314 = vpop.f32.mrf.mxu0
        %v1315 = vadd.f32 %v1286, %v1314
        %1316 = vdwg.mxu0
        %1317 = vmatpush.msra.mxu0 %v698
        %1318 = vmatpush.msra.mxu0 %v694
        %1319 = vmatpush.msra.mxu0 %v690
        %1320 = vmatpush.msra.mxu0 %v686
        %1321 = vmatpush.msra.mxu0 %v682
        %1322 = vmatpush.msra.mxu0 %v678
        %1323 = vmatpush.msra.mxu0 %v674
        %1324 = vmatpush.msra.mxu0 %v670
        %1325 = vmatpush.msra.mxu0 %v666
        %1326 = vmatpush.msra.mxu0 %v662
        %1327 = vmatpush.msra.mxu0 %v658
        %1328 = vmatpush.msra.mxu0 %v654
        %1329 = vmatpush.msra.mxu0 %v650
        %1330 = vmatpush.msra.mxu0 %v646
        %1331 = vmatpush.msra.mxu0 %v642
        %1332 = vmatpush.msra.mxu0 %v638
        %1333 = vmatmul.f32.gmra.mxu0 %v356
        %v1334 = vpop.f32.mrf.mxu0
        %v1335 = vadd.f32 %v1306, %v1334
        %1336 = vmatmul.f32.gmra.mxu0 %v363
        %v1337 = vpop.f32.mrf.mxu0
        %v1338 = vadd.f32 %v1309, %v1337
        %1339 = vmatmul.f32.gmra.mxu0 %v370
        %v1340 = vpop.f32.mrf.mxu0
        %v1341 = vadd.f32 %v1312, %v1340
        %1342 = vmatmul.f32.gmra.mxu0 %v377
        %v1343 = vpop.f32.mrf.mxu0
        %v1344 = vadd.f32 %v1315, %v1343
        %1345 = vdwg.mxu0
        %1346 = vmatpush.msra.mxu0 %v762
        %1347 = vmatpush.msra.mxu0 %v758
        %1348 = vmatpush.msra.mxu0 %v754
        %1349 = vmatpush.msra.mxu0 %v750
        %1350 = vmatpush.msra.mxu0 %v746
        %1351 = vmatpush.msra.mxu0 %v742
        %1352 = vmatpush.msra.mxu0 %v738
        %1353 = vmatpush.msra.mxu0 %v734
        %1354 = vmatpush.msra.mxu0 %v730
        %1355 = vmatpush.msra.mxu0 %v726
        %1356 = vmatpush.msra.mxu0 %v722
        %1357 = vmatpush.msra.mxu0 %v718
        %1358 = vmatpush.msra.mxu0 %v714
        %1359 = vmatpush.msra.mxu0 %v710
        %1360 = vmatpush.msra.mxu0 %v706
        %1361 = vmatpush.msra.mxu0 %v702
        %1362 = vmatmul.f32.gmra.mxu0 %v357
        %v1363 = vpop.f32.mrf.mxu0
        %v1364 = vadd.f32 %v1335, %v1363
        %1365 = vmatmul.f32.gmra.mxu0 %v364
        %v1366 = vpop.f32.mrf.mxu0
        %v1367 = vadd.f32 %v1338, %v1366
        %1368 = vmatmul.f32.gmra.mxu0 %v371
        %v1369 = vpop.f32.mrf.mxu0
        %v1370 = vadd.f32 %v1341, %v1369
        %1371 = vmatmul.f32.gmra.mxu0 %v378
        %v1372 = vpop.f32.mrf.mxu0
        %v1373 = vadd.f32 %v1344, %v1372
        %1374 = vdwg.mxu0
        %1375 = vmatpush.msra.mxu0 0.0
        %1376 = vmatpush.msra.mxu0 0.0
        %1377 = vmatpush.msra.mxu0 0.0
        %1378 = vmatpush.msra.mxu0 0.0
        %1379 = vmatpush.msra.mxu0 0.0
        %1380 = vmatpush.msra.mxu0 0.0
        %1381 = vmatpush.msra.mxu0 0.0
        %1382 = vmatpush.msra.mxu0 0.0
        %1383 = vmatpush.msra.mxu0 0.0
        %1384 = vmatpush.msra.mxu0 0.0
        %1385 = vmatpush.msra.mxu0 0.0
        %1386 = vmatpush.msra.mxu0 0.0
        %1387 = vmatpush.msra.mxu0 0.0
        %1388 = vmatpush.msra.mxu0 0.0
        %1389 = vmatpush.msra.mxu0 %v770
        %1390 = vmatpush.msra.mxu0 %v766
        %1391 = vmatmul.f32.gmra.mxu0 %v784
        %v1392 = vpop.f32.mrf.mxu0
        %v1393 = vadd.f32 %v1364, %v1392
        %1394 = vmatmul.f32.gmra.mxu0 %v787
        %v1395 = vpop.f32.mrf.mxu0
        %v1396 = vadd.f32 %v1367, %v1395
        %1397 = vmatmul.f32.gmra.mxu0 %v790
        %v1398 = vpop.f32.mrf.mxu0
        %v1399 = vadd.f32 %v1370, %v1398
        %1400 = vmatmul.f32.gmra.mxu0 %v793
        %v1401 = vpop.f32.mrf.mxu0
        %v1402 = vadd.f32 %v1373, %v1401
        %1403 = vdwg.mxu0
        %1404 = vmatpush.msra.mxu0 %v443
        %1405 = vmatpush.msra.mxu0 %v439
        %1406 = vmatpush.msra.mxu0 %v435
        %1407 = vmatpush.msra.mxu0 %v431
        %1408 = vmatpush.msra.mxu0 %v427
        %1409 = vmatpush.msra.mxu0 %v423
        %1410 = vmatpush.msra.mxu0 %v419
        %1411 = vmatpush.msra.mxu0 %v415
        %1412 = vmatpush.msra.mxu0 %v411
        %1413 = vmatpush.msra.mxu0 %v407
        %1414 = vmatpush.msra.mxu0 %v403
        %1415 = vmatpush.msra.mxu0 %v399
        %1416 = vmatpush.msra.mxu0 %v395
        %1417 = vmatpush.msra.mxu0 %v391
        %1418 = vmatpush.msra.mxu0 %v387
        %1419 = vmatpush.msra.mxu0 %v383
        %1420 = vmatmul.f32.gmra.mxu0 %v352
        %v1421 = vpop.f32.mrf.mxu0
        %v1422 = vadd.f32 %v777, %v1421
        %1423 = vmatmul.f32.gmra.mxu0 %v359
        %v1424 = vpop.f32.mrf.mxu0
        %v1425 = vadd.f32 %v777, %v1424
        %1426 = vmatmul.f32.gmra.mxu0 %v366
        %v1427 = vpop.f32.mrf.mxu0
        %v1428 = vadd.f32 %v777, %v1427
        %1429 = vmatmul.f32.gmra.mxu0 %v373
        %v1430 = vpop.f32.mrf.mxu0
        %v1431 = vadd.f32 %v777, %v1430
        %1432 = vdwg.mxu0
        %1433 = vmatpush.msra.mxu0 %v507
        %1434 = vmatpush.msra.mxu0 %v503
        %1435 = vmatpush.msra.mxu0 %v499
        %1436 = vmatpush.msra.mxu0 %v495
        %1437 = vmatpush.msra.mxu0 %v491
        %1438 = vmatpush.msra.mxu0 %v487
        %1439 = vmatpush.msra.mxu0 %v483
        %1440 = vmatpush.msra.mxu0 %v479
        %1441 = vmatpush.msra.mxu0 %v475
        %1442 = vmatpush.msra.mxu0 %v471
        %1443 = vmatpush.msra.mxu0 %v467
        %1444 = vmatpush.msra.mxu0 %v463
        %1445 = vmatpush.msra.mxu0 %v459
        %1446 = vmatpush.msra.mxu0 %v455
        %1447 = vmatpush.msra.mxu0 %v451
        %1448 = vmatpush.msra.mxu0 %v447
        %1449 = vmatmul.f32.gmra.mxu0 %v353
        %v1450 = vpop.f32.mrf.mxu0
        %v1451 = vadd.f32 %v1422, %v1450
        %1452 = vmatmul.f32.gmra.mxu0 %v360
        %v1453 = vpop.f32.mrf.mxu0
        %v1454 = vadd.f32 %v1425, %v1453
        %1455 = vmatmul.f32.gmra.mxu0 %v367
        %v1456 = vpop.f32.mrf.mxu0
        %v1457 = vadd.f32 %v1428, %v1456
        %1458 = vmatmul.f32.gmra.mxu0 %v374
        %v1459 = vpop.f32.mrf.mxu0
        %v1460 = vadd.f32 %v1431, %v1459
        %1461 = vdwg.mxu0
        %1462 = vmatpush.msra.mxu0 %v571
        %1463 = vmatpush.msra.mxu0 %v567
        %1464 = vmatpush.msra.mxu0 %v563
        %1465 = vmatpush.msra.mxu0 %v559
        %1466 = vmatpush.msra.mxu0 %v555
        %1467 = vmatpush.msra.mxu0 %v551
        %1468 = vmatpush.msra.mxu0 %v547
        %1469 = vmatpush.msra.mxu0 %v543
        %1470 = vmatpush.msra.mxu0 %v539
        %1471 = vmatpush.msra.mxu0 %v535
        %1472 = vmatpush.msra.mxu0 %v531
        %1473 = vmatpush.msra.mxu0 %v527
        %1474 = vmatpush.msra.mxu0 %v523
        %1475 = vmatpush.msra.mxu0 %v519
        %1476 = vmatpush.msra.mxu0 %v515
        %1477 = vmatpush.msra.mxu0 %v511
        %1478 = vmatmul.f32.gmra.mxu0 %v354
        %v1479 = vpop.f32.mrf.mxu0
        %v1480 = vadd.f32 %v1451, %v1479
        %1481 = vmatmul.f32.gmra.mxu0 %v361
        %v1482 = vpop.f32.mrf.mxu0
        %v1483 = vadd.f32 %v1454, %v1482
        %1484 = vmatmul.f32.gmra.mxu0 %v368
        %v1485 = vpop.f32.mrf.mxu0
        %v1486 = vadd.f32 %v1457, %v1485
        %1487 = vmatmul.f32.gmra.mxu0 %v375
        %v1488 = vpop.f32.mrf.mxu0
        %v1489 = vadd.f32 %v1460, %v1488
        %1490 = vdwg.mxu0
        %1491 = vmatpush.msra.mxu0 %v635
        %1492 = vmatpush.msra.mxu0 %v631
        %1493 = vmatpush.msra.mxu0 %v627
        %1494 = vmatpush.msra.mxu0 %v623
        %1495 = vmatpush.msra.mxu0 %v619
        %1496 = vmatpush.msra.mxu0 %v615
        %1497 = vmatpush.msra.mxu0 %v611
        %1498 = vmatpush.msra.mxu0 %v607
        %1499 = vmatpush.msra.mxu0 %v603
        %1500 = vmatpush.msra.mxu0 %v599
        %1501 = vmatpush.msra.mxu0 %v595
        %1502 = vmatpush.msra.mxu0 %v591
        %1503 = vmatpush.msra.mxu0 %v587
        %1504 = vmatpush.msra.mxu0 %v583
        %1505 = vmatpush.msra.mxu0 %v579
        %1506 = vmatpush.msra.mxu0 %v575
        %1507 = vmatmul.f32.gmra.mxu0 %v355
        %v1508 = vpop.f32.mrf.mxu0
        %v1509 = vadd.f32 %v1480, %v1508
        %1510 = vmatmul.f32.gmra.mxu0 %v362
        %v1511 = vpop.f32.mrf.mxu0
        %v1512 = vadd.f32 %v1483, %v1511
        %1513 = vmatmul.f32.gmra.mxu0 %v369
        %v1514 = vpop.f32.mrf.mxu0
        %v1515 = vadd.f32 %v1486, %v1514
        %1516 = vmatmul.f32.gmra.mxu0 %v376
        %v1517 = vpop.f32.mrf.mxu0
        %v1518 = vadd.f32 %v1489, %v1517
        %1519 = vdwg.mxu0
        %1520 = vmatpush.msra.mxu0 %v699
        %1521 = vmatpush.msra.mxu0 %v695
        %1522 = vmatpush.msra.mxu0 %v691
        %1523 = vmatpush.msra.mxu0 %v687
        %1524 = vmatpush.msra.mxu0 %v683
        %1525 = vmatpush.msra.mxu0 %v679
        %1526 = vmatpush.msra.mxu0 %v675
        %1527 = vmatpush.msra.mxu0 %v671
        %1528 = vmatpush.msra.mxu0 %v667
        %1529 = vmatpush.msra.mxu0 %v663
        %1530 = vmatpush.msra.mxu0 %v659
        %1531 = vmatpush.msra.mxu0 %v655
        %1532 = vmatpush.msra.mxu0 %v651
        %1533 = vmatpush.msra.mxu0 %v647
        %1534 = vmatpush.msra.mxu0 %v643
        %1535 = vmatpush.msra.mxu0 %v639
        %1536 = vmatmul.f32.gmra.mxu0 %v356
        %v1537 = vpop.f32.mrf.mxu0
        %v1538 = vadd.f32 %v1509, %v1537
        %1539 = vmatmul.f32.gmra.mxu0 %v363
        %v1540 = vpop.f32.mrf.mxu0
        %v1541 = vadd.f32 %v1512, %v1540
        %1542 = vmatmul.f32.gmra.mxu0 %v370
        %v1543 = vpop.f32.mrf.mxu0
        %v1544 = vadd.f32 %v1515, %v1543
        %1545 = vmatmul.f32.gmra.mxu0 %v377
        %v1546 = vpop.f32.mrf.mxu0
        %v1547 = vadd.f32 %v1518, %v1546
        %1548 = vdwg.mxu0
        %1549 = vmatpush.msra.mxu0 %v763
        %1550 = vmatpush.msra.mxu0 %v759
        %1551 = vmatpush.msra.mxu0 %v755
        %1552 = vmatpush.msra.mxu0 %v751
        %1553 = vmatpush.msra.mxu0 %v747
        %1554 = vmatpush.msra.mxu0 %v743
        %1555 = vmatpush.msra.mxu0 %v739
        %1556 = vmatpush.msra.mxu0 %v735
        %1557 = vmatpush.msra.mxu0 %v731
        %1558 = vmatpush.msra.mxu0 %v727
        %1559 = vmatpush.msra.mxu0 %v723
        %1560 = vmatpush.msra.mxu0 %v719
        %1561 = vmatpush.msra.mxu0 %v715
        %1562 = vmatpush.msra.mxu0 %v711
        %1563 = vmatpush.msra.mxu0 %v707
        %1564 = vmatpush.msra.mxu0 %v703
        %1565 = vmatmul.f32.gmra.mxu0 %v357
        %v1566 = vpop.f32.mrf.mxu0
        %v1567 = vadd.f32 %v1538, %v1566
        %1568 = vmatmul.f32.gmra.mxu0 %v364
        %v1569 = vpop.f32.mrf.mxu0
        %v1570 = vadd.f32 %v1541, %v1569
        %1571 = vmatmul.f32.gmra.mxu0 %v371
        %v1572 = vpop.f32.mrf.mxu0
        %v1573 = vadd.f32 %v1544, %v1572
        %1574 = vmatmul.f32.gmra.mxu0 %v378
        %v1575 = vpop.f32.mrf.mxu0
        %v1576 = vadd.f32 %v1547, %v1575
        %1577 = vdwg.mxu0
        %1578 = vmatpush.msra.mxu0 0.0
        %1579 = vmatpush.msra.mxu0 0.0
        %1580 = vmatpush.msra.mxu0 0.0
        %1581 = vmatpush.msra.mxu0 0.0
        %1582 = vmatpush.msra.mxu0 0.0
        %1583 = vmatpush.msra.mxu0 0.0
        %1584 = vmatpush.msra.mxu0 0.0
        %1585 = vmatpush.msra.mxu0 0.0
        %1586 = vmatpush.msra.mxu0 0.0
        %1587 = vmatpush.msra.mxu0 0.0
        %1588 = vmatpush.msra.mxu0 0.0
        %1589 = vmatpush.msra.mxu0 0.0
        %1590 = vmatpush.msra.mxu0 0.0
        %1591 = vmatpush.msra.mxu0 0.0
        %1592 = vmatpush.msra.mxu0 %v771
        %1593 = vmatpush.msra.mxu0 %v767
        %1594 = vmatmul.f32.gmra.mxu0 %v784
        %v1595 = vpop.f32.mrf.mxu0
        %v1596 = vadd.f32 %v1567, %v1595
        %1597 = vmatmul.f32.gmra.mxu0 %v787
        %v1598 = vpop.f32.mrf.mxu0
        %v1599 = vadd.f32 %v1570, %v1598
        %1600 = vmatmul.f32.gmra.mxu0 %v790
        %v1601 = vpop.f32.mrf.mxu0
        %v1602 = vadd.f32 %v1573, %v1601
        %1603 = vmatmul.f32.gmra.mxu0 %v793
        %v1604 = vpop.f32.mrf.mxu0
        %v1605 = vadd.f32 %v1576, %v1604
        %1606 = vdwg.mxu0
        %v1607 = vmax.f32 %v987, 0.0
        %v1608 = vmax.f32 %v1190, 0.0
        %v1609 = vmax.f32 %v1393, 0.0
        %v1610 = vmax.f32 %v1596, 0.0
        %v1611 = vmax.f32 %v990, 0.0
        %v1612 = vmax.f32 %v1193, 0.0
        %v1613 = vmax.f32 %v1396, 0.0
        %v1614 = vmax.f32 %v1599, 0.0
        %v1615 = vmax.f32 %v993, 0.0
        %v1616 = vmax.f32 %v1196, 0.0
        %v1617 = vmax.f32 %v1399, 0.0
        %v1618 = vmax.f32 %v1602, 0.0
        %v1619 = vmax.f32 %v996, 0.0
        %v1620 = vmax.f32 %v1199, 0.0
        %v1621 = vmax.f32 %v1402, 0.0
        %v1622 = vmax.f32 %v1605, 0.0
        %v1623 = vld [vmem:[#allocation8] sm:$0xff]
        %v1624 = vld [vmem:[#allocation8 + $0x8] sm:$0xff]
        %v1625 = vld [vmem:[#allocation8 + $0x10] sm:$0xff]
        %v1626 = vld [vmem:[#allocation8 + $0x18] sm:$0xff]
        %v1627 = vld [vmem:[#allocation8 + $0x20] sm:$0xff]
        %v1628 = vld [vmem:[#allocation8 + $0x28] sm:$0xff]
        %v1629 = vld [vmem:[#allocation8 + $0x30] sm:$0xff]
        %v1630 = vld [vmem:[#allocation8 + $0x38] sm:$0xff]
        %v1631 = vld [vmem:[#allocation8 + $0x40] sm:$0xff]
        %v1632 = vld [vmem:[#allocation8 + $0x48] sm:$0xff]
        %v1633 = vld [vmem:[#allocation8 + $0x50] sm:$0xff]
        %v1634 = vld [vmem:[#allocation8 + $0x58] sm:$0xff]
        %v1635 = vld [vmem:[#allocation8 + $0x60] sm:$0xff]
        %v1636 = vld [vmem:[#allocation8 + $0x68] sm:$0xff]
        %v1637 = vld [vmem:[#allocation8 + $0x70] sm:$0xff]
        %v1638 = vld [vmem:[#allocation8 + $0x78] sm:$0xff]
        %v1639 = vld [vmem:[#allocation8 + $0x80] sm:$0xff]
        %v1640 = vld [vmem:[#allocation8 + $0x88] sm:$0xff]
        %v1641 = vld [vmem:[#allocation8 + $0x90] sm:$0xff]
        %v1642 = vld [vmem:[#allocation8 + $0x98] sm:$0xff]
        %v1643 = vld [vmem:[#allocation8 + $0xa0] sm:$0xff]
        %v1644 = vld [vmem:[#allocation8 + $0xa8] sm:$0xff]
        %v1645 = vld [vmem:[#allocation8 + $0xb0] sm:$0xff]
        %v1646 = vld [vmem:[#allocation8 + $0xb8] sm:$0xff]
        %v1647 = vld [vmem:[#allocation8 + $0xc0] sm:$0xff]
        %v1648 = vld [vmem:[#allocation8 + $0xc8] sm:$0xff]
        %v1649 = vld [vmem:[#allocation8 + $0xd0] sm:$0xff]
        %v1650 = vld [vmem:[#allocation8 + $0xd8] sm:$0xff]
        %v1651 = vld [vmem:[#allocation8 + $0xe0] sm:$0xff]
        %v1652 = vld [vmem:[#allocation8 + $0xe8] sm:$0xff]
        %v1653 = vld [vmem:[#allocation8 + $0xf0] sm:$0xff]
        %v1654 = vld [vmem:[#allocation8 + $0xf8] sm:$0xff]
        %v1655 = vld [vmem:[#allocation8 + $0x100] sm:$0xff]
        %v1656 = vld [vmem:[#allocation8 + $0x108] sm:$0xff]
        %v1657 = vld [vmem:[#allocation8 + $0x110] sm:$0xff]
        %v1658 = vld [vmem:[#allocation8 + $0x118] sm:$0xff]
        %v1659 = vld [vmem:[#allocation8 + $0x120] sm:$0xff]
        %v1660 = vld [vmem:[#allocation8 + $0x128] sm:$0xff]
        %v1661 = vld [vmem:[#allocation8 + $0x130] sm:$0xff]
        %v1662 = vld [vmem:[#allocation8 + $0x138] sm:$0xff]
        %v1663 = vld [vmem:[#allocation8 + $0x140] sm:$0xff]
        %v1664 = vld [vmem:[#allocation8 + $0x148] sm:$0xff]
        %v1665 = vld [vmem:[#allocation8 + $0x150] sm:$0xff]
        %v1666 = vld [vmem:[#allocation8 + $0x158] sm:$0xff]
        %v1667 = vld [vmem:[#allocation8 + $0x160] sm:$0xff]
        %v1668 = vld [vmem:[#allocation8 + $0x168] sm:$0xff]
        %v1669 = vld [vmem:[#allocation8 + $0x170] sm:$0xff]
        %v1670 = vld [vmem:[#allocation8 + $0x178] sm:$0xff]
        %v1671 = vld [vmem:[#allocation8 + $0x180] sm:$0xff]
        %v1672 = vld [vmem:[#allocation8 + $0x188] sm:$0xff]
        %v1673 = vld [vmem:[#allocation8 + $0x190] sm:$0xff]
        %v1674 = vld [vmem:[#allocation8 + $0x198] sm:$0xff]
        %v1675 = vld [vmem:[#allocation8 + $0x1a0] sm:$0xff]
        %v1676 = vld [vmem:[#allocation8 + $0x1a8] sm:$0xff]
        %v1677 = vld [vmem:[#allocation8 + $0x1b0] sm:$0xff]
        %v1678 = vld [vmem:[#allocation8 + $0x1b8] sm:$0xff]
        %v1679 = vld [vmem:[#allocation8 + $0x1c0] sm:$0xff]
        %v1680 = vld [vmem:[#allocation8 + $0x1c8] sm:$0xff]
        %v1681 = vld [vmem:[#allocation8 + $0x1d0] sm:$0xff]
        %v1682 = vld [vmem:[#allocation8 + $0x1d8] sm:$0xff]
        %v1683 = vld [vmem:[#allocation8 + $0x1e0] sm:$0xff]
        %v1684 = vld [vmem:[#allocation8 + $0x1e8] sm:$0xff]
        %v1685 = vld [vmem:[#allocation8 + $0x1f0] sm:$0xff]
        %v1686 = vld [vmem:[#allocation8 + $0x1f8] sm:$0xff]
        %v1687 = vld [vmem:[#allocation10] sm:$0x1]
        %v1689 = vperm.slane %v1687, 0
        %1691 = vmatpush.msra.mxu0 %v1638
        %1692 = vmatpush.msra.mxu0 %v1637
        %1693 = vmatpush.msra.mxu0 %v1636
        %1694 = vmatpush.msra.mxu0 %v1635
        %1695 = vmatpush.msra.mxu0 %v1634
        %1696 = vmatpush.msra.mxu0 %v1633
        %1697 = vmatpush.msra.mxu0 %v1632
        %1698 = vmatpush.msra.mxu0 %v1631
        %1699 = vmatpush.msra.mxu0 %v1630
        %1700 = vmatpush.msra.mxu0 %v1629
        %1701 = vmatpush.msra.mxu0 %v1628
        %1702 = vmatpush.msra.mxu0 %v1627
        %1703 = vmatpush.msra.mxu0 %v1626
        %1704 = vmatpush.msra.mxu0 %v1625
        %1705 = vmatpush.msra.mxu0 %v1624
        %1706 = vmatpush.msra.mxu0 %v1623
        %1707 = vmatmul.f32.gmra.mxu0 %v1607
        %v1708 = vpop.f32.mrf.mxu0
        %v1709 = vadd.f32 %v1689, %v1708
        %1710 = vmatmul.f32.gmra.mxu0 %v1611
        %v1711 = vpop.f32.mrf.mxu0
        %v1712 = vadd.f32 %v1689, %v1711
        %1713 = vmatmul.f32.gmra.mxu0 %v1615
        %v1714 = vpop.f32.mrf.mxu0
        %v1715 = vadd.f32 %v1689, %v1714
        %1716 = vmatmul.f32.gmra.mxu0 %v1619
        %v1717 = vpop.f32.mrf.mxu0
        %v1718 = vadd.f32 %v1689, %v1717
        %1719 = vdwg.mxu0
        %1720 = vmatpush.msra.mxu0 %v1654
        %1721 = vmatpush.msra.mxu0 %v1653
        %1722 = vmatpush.msra.mxu0 %v1652
        %1723 = vmatpush.msra.mxu0 %v1651
        %1724 = vmatpush.msra.mxu0 %v1650
        %1725 = vmatpush.msra.mxu0 %v1649
        %1726 = vmatpush.msra.mxu0 %v1648
        %1727 = vmatpush.msra.mxu0 %v1647
        %1728 = vmatpush.msra.mxu0 %v1646
        %1729 = vmatpush.msra.mxu0 %v1645
        %1730 = vmatpush.msra.mxu0 %v1644
        %1731 = vmatpush.msra.mxu0 %v1643
        %1732 = vmatpush.msra.mxu0 %v1642
        %1733 = vmatpush.msra.mxu0 %v1641
        %1734 = vmatpush.msra.mxu0 %v1640
        %1735 = vmatpush.msra.mxu0 %v1639
        %1736 = vmatmul.f32.gmra.mxu0 %v1608
        %v1737 = vpop.f32.mrf.mxu0
        %v1738 = vadd.f32 %v1709, %v1737
        %1739 = vmatmul.f32.gmra.mxu0 %v1612
        %v1740 = vpop.f32.mrf.mxu0
        %v1741 = vadd.f32 %v1712, %v1740
        %1742 = vmatmul.f32.gmra.mxu0 %v1616
        %v1743 = vpop.f32.mrf.mxu0
        %v1744 = vadd.f32 %v1715, %v1743
        %1745 = vmatmul.f32.gmra.mxu0 %v1620
        %v1746 = vpop.f32.mrf.mxu0
        %v1747 = vadd.f32 %v1718, %v1746
        %1748 = vdwg.mxu0
        %1749 = vmatpush.msra.mxu0 %v1670
        %1750 = vmatpush.msra.mxu0 %v1669
        %1751 = vmatpush.msra.mxu0 %v1668
        %1752 = vmatpush.msra.mxu0 %v1667
        %1753 = vmatpush.msra.mxu0 %v1666
        %1754 = vmatpush.msra.mxu0 %v1665
        %1755 = vmatpush.msra.mxu0 %v1664
        %1756 = vmatpush.msra.mxu0 %v1663
        %1757 = vmatpush.msra.mxu0 %v1662
        %1758 = vmatpush.msra.mxu0 %v1661
        %1759 = vmatpush.msra.mxu0 %v1660
        %1760 = vmatpush.msra.mxu0 %v1659
        %1761 = vmatpush.msra.mxu0 %v1658
        %1762 = vmatpush.msra.mxu0 %v1657
        %1763 = vmatpush.msra.mxu0 %v1656
        %1764 = vmatpush.msra.mxu0 %v1655
        %1765 = vmatmul.f32.gmra.mxu0 %v1609
        %v1766 = vpop.f32.mrf.mxu0
        %v1767 = vadd.f32 %v1738, %v1766
        %1768 = vmatmul.f32.gmra.mxu0 %v1613
        %v1769 = vpop.f32.mrf.mxu0
        %v1770 = vadd.f32 %v1741, %v1769
        %1771 = vmatmul.f32.gmra.mxu0 %v1617
        %v1772 = vpop.f32.mrf.mxu0
        %v1773 = vadd.f32 %v1744, %v1772
        %1774 = vmatmul.f32.gmra.mxu0 %v1621
        %v1775 = vpop.f32.mrf.mxu0
        %v1776 = vadd.f32 %v1747, %v1775
        %1777 = vdwg.mxu0
        %1778 = vmatpush.msra.mxu0 %v1686
        %1779 = vmatpush.msra.mxu0 %v1685
        %1780 = vmatpush.msra.mxu0 %v1684
        %1781 = vmatpush.msra.mxu0 %v1683
        %1782 = vmatpush.msra.mxu0 %v1682
        %1783 = vmatpush.msra.mxu0 %v1681
        %1784 = vmatpush.msra.mxu0 %v1680
        %1785 = vmatpush.msra.mxu0 %v1679
        %1786 = vmatpush.msra.mxu0 %v1678
        %1787 = vmatpush.msra.mxu0 %v1677
        %1788 = vmatpush.msra.mxu0 %v1676
        %1789 = vmatpush.msra.mxu0 %v1675
        %1790 = vmatpush.msra.mxu0 %v1674
        %1791 = vmatpush.msra.mxu0 %v1673
        %1792 = vmatpush.msra.mxu0 %v1672
        %1793 = vmatpush.msra.mxu0 %v1671
        %1794 = vmatmul.f32.gmra.mxu0 %v1610
        %v1795 = vpop.f32.mrf.mxu0
        %v1796 = vadd.f32 %v1767, %v1795
        %1797 = vmatmul.f32.gmra.mxu0 %v1614
        %v1798 = vpop.f32.mrf.mxu0
        %v1799 = vadd.f32 %v1770, %v1798
        %1800 = vmatmul.f32.gmra.mxu0 %v1618
        %v1801 = vpop.f32.mrf.mxu0
        %v1802 = vadd.f32 %v1773, %v1801
        %1803 = vmatmul.f32.gmra.mxu0 %v1622
        %v1804 = vpop.f32.mrf.mxu0
        %v1805 = vadd.f32 %v1776, %v1804
        %1806 = vdwg.mxu0
        %v1807 = vld [vmem:[#allocation11] sm:$0x1]
        %vm1808 = vcmp.gt.f32.partialorder %v1807, 0.5
        %v1809 = vmax.f32 %v1796, 0.0
        %v1810 = vmax.f32 %v1799, 0.0
        %v1811 = vmax.f32 %v1802, 0.0
        %v1812 = vmax.f32 %v1805, 0.0
        %v1813 = vsel %vm1808, 1, 0
        %v1814 = vperm.slane %v1813, 0
        %vm1815 = vcmp.eq.s32.totalorder %v1814, 1
        %v1816 = vsel %vm1815, %v1809, %v1796
        %v1817 = vsel %vm1815, %v1810, %v1799
        %v1818 = vsel %vm1815, %v1811, %v1802
        %v1819 = vsel %vm1815, %v1812, %v1805
        %1820 = vst [vmem:[%s349] sm:$0xff] %v1816
        %1821 = vst [vmem:[%s349 + $0x8] sm:$0xff] %v1817
        %1822 = vst [vmem:[%s349 + $0x10] sm:$0xff] %v1818
        %1823 = vst [vmem:[%s349 + $0x18] sm:$0xff] %v1819
        %s1824 = sand.u32 %s165, 1
        %s1825 = scalar_lea.sflag [#allocation4], %s1824
        %s1826 = sand.u32 %s165, 1
        %s1827 = smul.addr %s1826, 32
        %s1828 = scalar_lea.vmem [#allocation13], %s1827
        // Predicated region
        $region69: #{tpu_custom_call.1} parent=43 // pred_check
          %p1829 = pneg %p175
        $region70: #{tpu_custom_call.1} parent=43 // pred_check_branch
          %1831 = sbr.rel (%p1829) target = $region72
        $region71: #{tpu_custom_call.1} parent=43 // pred_region
          %s1832 = smul.u32 4, %s26
          %1834 = vsyncadd %s1825, 0
          %s1835 = smul.addr %s1832, 8
          %s1836 = scalar_lea.hbm %s6, %s1835
          %s1837 = sshll.u32 %s1828, 4
          %s1838 = int_to_ptr.vmem [resolvable:$true] %s1837
          %s1839 = sshll.u32 %s1836, 4
          %s1840 = int_to_ptr.hbm [resolvable:$true] %s1839
          %1845 = dma.vmem_to_hbm [thread:$0]  %s1838, 512, %s1840, %s1825, 128, 128, 8
        $region72: #{tpu_custom_call.1} parent=43 // pred_fallthru
          _
      $region44: #{tpu_custom_call.1} parent=5 // pred_fallthru
        _
      %p1846 = scmp.le.s32.totalorder 2, %s21
      // Predicated region
      $region73: #{tpu_custom_call.1} parent=5 // pred_check
        %p1847 = pneg %p1846
      $region74: #{tpu_custom_call.1} parent=5 // pred_check_branch
        %1849 = sbr.rel (%p1847) target = $region76
      $region75: #{tpu_custom_call.1} parent=5 // pred_region
        %s1850 = ssub.s32 %s21, 2
        // Predicated region
        $region77: #{tpu_custom_call.1} parent=75 // pred_check
          %p1851 = pneg %p181
        $region78: #{tpu_custom_call.1} parent=75 // pred_check_branch
          %1853 = sbr.rel (%p1851) target = $region80
        $region79: #{tpu_custom_call.1} parent=75 // pred_region
          %s1854 = sand.u32 %s166, 1
          %s1855 = scalar_lea.sflag [#allocation4], %s1854
          %s1856 = sand.u32 %s166, 1
          %s1857 = smul.addr %s1856, 32
          %s1858 = scalar_lea.vmem [#allocation13], %s1857
          %1860 = dma.done %s1855, 512
        $region80: #{tpu_custom_call.1} parent=75 // pred_fallthru
          _
      $region76: #{tpu_custom_call.1} parent=5 // pred_fallthru
        _
    $region6: #{tpu_custom_call.1} parent=1 // loop_footer
      %s25 = sadd.s32 1, %s21
    $region7: #{tpu_custom_call.1} parent=1 // loop_footer_branch
      %20 = sbr.rel target = $region3
    $region8: #{tpu_custom_call.1} parent=1 // loop_exit
      _
    %1861 = vsyncpa [#allocation3], 1
    %s1862 = scalar_lea.sflag [#allocation3], 1
    %1863 = vsyncpa %s1862, 1
    %1864 = vsyncpa [#allocation6], 1
    %1865 = vsyncpa [#allocation9], 1
    %1866 = vsyncpa [#allocation12], 1
    %1867 = vsyncpa [#allocation4], 1
    %s1868 = scalar_lea.sflag [#allocation4], 1
    %1869 = vsyncpa %s1868, 1

</llo_original>
